<compile_context>
chip_gen: v7x
topology: tpu7x:2x2x1
jax: 0.10.0
libtpu: 0.0.40
codegen_flags: <defaults>
</compile_context>

<pallas_src>
import jax
import jax.numpy as jnp
from jax.experimental import pallas as pl
from jax.experimental.pallas import tpu as pltpu

EPSILON = 1e-05


def _round_up(x, m):
    return (x + m - 1) // m * m


def _attention_kernel(rq_ref, rct_ref, mask_ref, c_ref, wo_ref, bo_ref,
                      out_ref, w_ref):
    # Per-(batch, candidate-tile) views (batch dim squeezed by BlockSpec):
    #   rq   : (TM, H)        -- pre-projected queries for this candidate tile
    #   rct  : (H, n_ctx)     -- pre-projected context, transposed (n_ctx on lanes)
    #   mask : (1|TM, n_ctx)
    #   c    : (n_ctx, C)
    TM = rq_ref.shape[0]
    rq = rq_ref[...]
    rct = rct_ref[...]
    wo = wo_ref[...]                                   # (1, H)

    # Scoring: one (H, n_ctx) tanh block per candidate (bounded live memory),
    # w_o contraction on the MXU with a lane-dense (1, n_ctx) result.
    rows = []
    for m in range(TM):                                # TM is small & static
        blk = jnp.tanh(rct + rq[m, :][:, None])        # (H, n_ctx)
        rows.append(jnp.dot(wo, blk,
                            preferred_element_type=jnp.float32))  # (1, n_ctx)
    logit = jnp.concatenate(rows, axis=0) + bo_ref[...]            # (TM, n_ctx)

    # Masked, overflow-safe exp-normalization.  shift = max(row_max, 0) keeps
    # the result bit-compatible with the reference when logits are <= 0 and
    # mathematically identical otherwise (numerator & denominator both scaled
    # by exp(-shift), epsilon scaled to match).
    valid = mask_ref[...] > 0.0                        # (1|TM, n_ctx) -> broadcast
    neg_inf = jnp.float32(-jnp.inf)
    row_max = jnp.max(jnp.where(valid, logit, neg_inf), axis=1, keepdims=True)
    shift = jnp.maximum(row_max, 0.0)                  # (TM, 1), never -inf
    w_exp = jnp.where(valid, jnp.exp(logit - shift), 0.0)
    denom = jnp.sum(w_exp, axis=1, keepdims=True) + EPSILON * jnp.exp(-shift)
    weights = w_exp * (1.0 / denom)                    # one reciprocal per row

    w_ref[...] = weights
    out_ref[...] = jnp.dot(weights, c_ref[...],
                           preferred_element_type=jnp.float32)     # (TM, C)


def attention_forward(query, context, params, mapping=None, mask=None, *,
                      cand_tile=8):
    """JAX wrapper reproducing Attention.forward(query, context, mapping, mask)."""
    query = query.astype(jnp.float32)
    context = context.astype(jnp.float32)
    B, n_cands, Q = query.shape
    _, n_ctx, C = context.shape
    H = params["wq_t"].shape[1]

    # --- mask normalization, matching the PyTorch branches (no n_cands broadcast) ---
    if mask is None:
        m = (mapping > 0.0).astype(jnp.float32)
    elif mask.ndim == 2:
        m = mask[:, None, :].astype(jnp.float32)
    else:
        m = mask.astype(jnp.float32)
    if m.ndim == 2:
        m = m[:, None, :]
    per_cand_mask = m.shape[1] != 1                    # (B, 1, n_ctx) or (B, n_cands, n_ctx)

    # --- hoisted projections: two big batched GEMMs (good MXU utilization) ---
    res_q = jnp.einsum("bnq,qh->bnh", query, params["wq_t"])                   # (B, n_cands, H)
    res_c = jnp.einsum("bkc,ch->bkh", context, params["wc_t"]) + params["bc"]  # (B, n_ctx, H)
    res_c_t = jnp.transpose(res_c, (0, 2, 1))                                  # (B, H, n_ctx)

    # --- candidate tiling (pad n_cands to a multiple of the tile) ---
    TM = n_cands if n_cands <= cand_tile else _round_up(cand_tile, 8)
    n_cands_p = _round_up(n_cands, TM)
    if n_cands_p != n_cands:
        pad = n_cands_p - n_cands
        res_q = jnp.pad(res_q, ((0, 0), (0, pad), (0, 0)))
        if per_cand_mask:
            m = jnp.pad(m, ((0, 0), (0, pad), (0, 0)))
    n_ct = n_cands_p // TM

    if per_cand_mask:
        mask_spec = pl.BlockSpec((None, TM, n_ctx), lambda b, t: (b, t, 0))
    else:
        mask_spec = pl.BlockSpec((None, 1, n_ctx), lambda b, t: (b, 0, 0))

    out_shapes = (
        jax.ShapeDtypeStruct((B, n_cands_p, C), jnp.float32),       # output
        jax.ShapeDtypeStruct((B, n_cands_p, n_ctx), jnp.float32),   # weights
    )

    out, w = pl.pallas_call(
        _attention_kernel,
        out_shape=out_shapes,
        grid=(B, n_ct),
        in_specs=[
            pl.BlockSpec((None, TM, H), lambda b, t: (b, t, 0)),      # res_q tile
            pl.BlockSpec((None, H, n_ctx), lambda b, t: (b, 0, 0)),   # res_c^T (per batch)
            mask_spec,                                                # mask (not pre-broadcast)
            pl.BlockSpec((None, n_ctx, C), lambda b, t: (b, 0, 0)),   # context (per batch)
            pl.BlockSpec((1, H), lambda b, t: (0, 0)),                # w_o
            pl.BlockSpec((1, 1), lambda b, t: (0, 0)),                # b_o
        ],
        out_specs=(
            pl.BlockSpec((None, TM, C), lambda b, t: (b, t, 0)),
            pl.BlockSpec((None, TM, n_ctx), lambda b, t: (b, t, 0)),
        ),
        compiler_params=pltpu.CompilerParams(
            dimension_semantics=("parallel", "parallel")),
    )(res_q, res_c_t, m, context, params["wo"], params["bo"])

    if n_cands_p != n_cands:
        out = out[:, :n_cands]
        w = w[:, :n_cands]
    return out, w


def _reference(query, context, mask3, params):
    """Pure-JAX reference implementing the original (unstabilized) formula."""
    res_q = query @ params["wq_t"]
    res_c = context @ params["wc_t"] + params["bc"]
    tmp = jnp.tanh(res_c[:, None, :, :] + res_q[:, :, None, :])
    logit = jnp.einsum("bijh,h->bij", tmp, params["wo"][0]) + params["bo"][0, 0]
    w_exp = mask3 * jnp.exp(logit)
    weights = w_exp / (jnp.sum(w_exp, axis=2, keepdims=True) + EPSILON)
    output = jnp.einsum("bij,bjc->bic", weights, context)
    return output, weights


if __name__ == "__main__":
    key = jax.random.PRNGKey(0)
    B, n_cands, n_ctx = 2, 16, 128
    query_size = 32
    context_size = 32
    hidden_size = 32

    ks = jax.random.split(key, 9)
    query = jax.random.normal(ks[0], (B, n_cands, query_size), jnp.float32)
    context = jax.random.normal(ks[1], (B, n_ctx, context_size), jnp.float32)
    # 2-D mask case (mask.unsqueeze(1) path)
    mask2d = (jax.random.uniform(ks[2], (B, n_ctx)) > 0.2).astype(jnp.float32)
    # mapping>0 path with a per-candidate mask
    mapping = jax.random.normal(ks[8], (B, n_cands, n_ctx), jnp.float32)

    # deterministic synthetic parameters (shapes from nn.Linear in __init__)
    params = {
        "wq_t": 0.1 * jax.random.normal(ks[3], (query_size, hidden_size), jnp.float32),
        "wc_t": 0.1 * jax.random.normal(ks[4], (context_size, hidden_size), jnp.float32),
        "bc":   0.1 * jax.random.normal(ks[5], (1, hidden_size), jnp.float32),
        "wo":   0.1 * jax.random.normal(ks[6], (1, hidden_size), jnp.float32),
        "bo":   0.1 * jax.random.normal(ks[7], (1, 1), jnp.float32),
    }

    out1, w1 = attention_forward(query, context, params, mask=mask2d)
    out2, w2 = attention_forward(query, context, params, mapping=mapping)
    jax.block_until_ready((out1, w1, out2, w2))

    mask3_a = jnp.broadcast_to(mask2d[:, None, :], (B, n_cands, n_ctx))
    ref_o1, ref_w1 = _reference(query, context, mask3_a, params)
    mask3_b = (mapping > 0.0).astype(jnp.float32)
    ref_o2, ref_w2 = _reference(query, context, mask3_b, params)

    assert jnp.allclose(out1, ref_o1, rtol=1e-5, atol=1e-4), "output mismatch (2-D mask)"
    assert jnp.allclose(w1, ref_w1, rtol=1e-5, atol=1e-4), "weights mismatch (2-D mask)"
    assert jnp.allclose(out2, ref_o2, rtol=1e-5, atol=1e-4), "output mismatch (mapping)"
    assert jnp.allclose(w2, ref_w2, rtol=1e-5, atol=1e-4), "weights mismatch (mapping)"

    print("KERNEL_OK")
</pallas_src>

<mosaic_0001>
module attributes {stable_mosaic.version = 11 : i64} {
  func.func @_attention_kernel(%arg0: i32, %arg1: i32, %arg2: memref<1x8x32xf32, #tpu.memory_space<vmem>>, %arg3: memref<1x32x128xf32, #tpu.memory_space<vmem>>, %arg4: memref<1x1x128xf32, #tpu.memory_space<vmem>>, %arg5: memref<1x128x32xf32, #tpu.memory_space<vmem>>, %arg6: memref<1x32xf32, #tpu.memory_space<vmem>>, %arg7: memref<1x1xf32, #tpu.memory_space<vmem>>, %arg8: memref<1x8x32xf32, #tpu.memory_space<vmem>>, %arg9: memref<1x8x128xf32, #tpu.memory_space<vmem>>) attributes {dimension_semantics = [#tpu.dimension_semantics<parallel>, #tpu.dimension_semantics<parallel>], iteration_bounds = array<i64: 2, 2>, scalar_prefetch = 0 : i64, scratch_operands = 0 : i64, tpu.core_type = #tpu.core_type<tc>, window_params = [{transform_indices = @transform_0, window_bounds = array<i64: 1, 8, 32>}, {transform_indices = @transform_1, window_bounds = array<i64: 1, 32, 128>}, {transform_indices = @transform_2, window_bounds = array<i64: 1, 1, 128>}, {transform_indices = @transform_3, window_bounds = array<i64: 1, 128, 32>}, {pipeline_mode = #tpu.pipeline_mode<synchronous>, transform_indices = @transform_4, window_bounds = array<i64: 1, 32>}, {pipeline_mode = #tpu.pipeline_mode<synchronous>, transform_indices = @transform_5, window_bounds = array<i64: 1, 1>}, {transform_indices = @transform_6, window_bounds = array<i64: 1, 8, 32>}, {transform_indices = @transform_7, window_bounds = array<i64: 1, 8, 128>}]} {
    %c0 = arith.constant 0 : index
    %c0_0 = arith.constant 0 : index
    %c0_1 = arith.constant 0 : index
    %0 = vector.load %arg2[%c0, %c0_0, %c0_1] : memref<1x8x32xf32, #tpu.memory_space<vmem>>, vector<1x8x32xf32>
    %1 = vector.shape_cast %0 : vector<1x8x32xf32> to vector<8x32xf32>
    %c0_2 = arith.constant 0 : index
    %c0_3 = arith.constant 0 : index
    %c0_4 = arith.constant 0 : index
    %2 = vector.load %arg3[%c0_2, %c0_3, %c0_4] : memref<1x32x128xf32, #tpu.memory_space<vmem>>, vector<1x32x128xf32>
    %3 = vector.shape_cast %2 : vector<1x32x128xf32> to vector<32x128xf32>
    %c0_5 = arith.constant 0 : index
    %c0_6 = arith.constant 0 : index
    %4 = vector.load %arg6[%c0_5, %c0_6] : memref<1x32xf32, #tpu.memory_space<vmem>>, vector<1x32xf32>
    %5 = vector.extract_strided_slice %1 {offsets = [0, 0], sizes = [1, 32], strides = [1, 1]} : vector<8x32xf32> to vector<1x32xf32>
    %6 = vector.shape_cast %5 : vector<1x32xf32> to vector<32xf32>
    %7 = vector.shape_cast %6 : vector<32xf32> to vector<32x1xf32>
    %8 = vector.broadcast %7 : vector<32x1xf32> to vector<32x128xf32>
    %9 = arith.addf %3, %8 : vector<32x128xf32>
    %10 = math.tanh %9 : vector<32x128xf32>
    %cst = arith.constant dense<0.000000e+00> : vector<1x128xf32>
    %11 = tpu.matmul %4, %10, %cst {dimension_numbers = #tpu.dot_dimension_numbers<[1], [0], [0], [1], [0, 0, 1, 1], [], []>} : vector<1x32xf32>, vector<32x128xf32>, vector<1x128xf32> -> vector<1x128xf32>
    %12 = vector.extract_strided_slice %1 {offsets = [1, 0], sizes = [1, 32], strides = [1, 1]} : vector<8x32xf32> to vector<1x32xf32>
    %13 = vector.shape_cast %12 : vector<1x32xf32> to vector<32xf32>
    %14 = vector.shape_cast %13 : vector<32xf32> to vector<32x1xf32>
    %15 = vector.broadcast %14 : vector<32x1xf32> to vector<32x128xf32>
    %16 = arith.addf %3, %15 : vector<32x128xf32>
    %17 = math.tanh %16 : vector<32x128xf32>
    %cst_7 = arith.constant dense<0.000000e+00> : vector<1x128xf32>
    %18 = tpu.matmul %4, %17, %cst_7 {dimension_numbers = #tpu.dot_dimension_numbers<[1], [0], [0], [1], [0, 0, 1, 1], [], []>} : vector<1x32xf32>, vector<32x128xf32>, vector<1x128xf32> -> vector<1x128xf32>
    %19 = vector.extract_strided_slice %1 {offsets = [2, 0], sizes = [1, 32], strides = [1, 1]} : vector<8x32xf32> to vector<1x32xf32>
    %20 = vector.shape_cast %19 : vector<1x32xf32> to vector<32xf32>
    %21 = vector.shape_cast %20 : vector<32xf32> to vector<32x1xf32>
    %22 = vector.broadcast %21 : vector<32x1xf32> to vector<32x128xf32>
    %23 = arith.addf %3, %22 : vector<32x128xf32>
    %24 = math.tanh %23 : vector<32x128xf32>
    %cst_8 = arith.constant dense<0.000000e+00> : vector<1x128xf32>
    %25 = tpu.matmul %4, %24, %cst_8 {dimension_numbers = #tpu.dot_dimension_numbers<[1], [0], [0], [1], [0, 0, 1, 1], [], []>} : vector<1x32xf32>, vector<32x128xf32>, vector<1x128xf32> -> vector<1x128xf32>
    %26 = vector.extract_strided_slice %1 {offsets = [3, 0], sizes = [1, 32], strides = [1, 1]} : vector<8x32xf32> to vector<1x32xf32>
    %27 = vector.shape_cast %26 : vector<1x32xf32> to vector<32xf32>
    %28 = vector.shape_cast %27 : vector<32xf32> to vector<32x1xf32>
    %29 = vector.broadcast %28 : vector<32x1xf32> to vector<32x128xf32>
    %30 = arith.addf %3, %29 : vector<32x128xf32>
    %31 = math.tanh %30 : vector<32x128xf32>
    %cst_9 = arith.constant dense<0.000000e+00> : vector<1x128xf32>
    %32 = tpu.matmul %4, %31, %cst_9 {dimension_numbers = #tpu.dot_dimension_numbers<[1], [0], [0], [1], [0, 0, 1, 1], [], []>} : vector<1x32xf32>, vector<32x128xf32>, vector<1x128xf32> -> vector<1x128xf32>
    %33 = vector.extract_strided_slice %1 {offsets = [4, 0], sizes = [1, 32], strides = [1, 1]} : vector<8x32xf32> to vector<1x32xf32>
    %34 = vector.shape_cast %33 : vector<1x32xf32> to vector<32xf32>
    %35 = vector.shape_cast %34 : vector<32xf32> to vector<32x1xf32>
    %36 = vector.broadcast %35 : vector<32x1xf32> to vector<32x128xf32>
    %37 = arith.addf %3, %36 : vector<32x128xf32>
    %38 = math.tanh %37 : vector<32x128xf32>
    %cst_10 = arith.constant dense<0.000000e+00> : vector<1x128xf32>
    %39 = tpu.matmul %4, %38, %cst_10 {dimension_numbers = #tpu.dot_dimension_numbers<[1], [0], [0], [1], [0, 0, 1, 1], [], []>} : vector<1x32xf32>, vector<32x128xf32>, vector<1x128xf32> -> vector<1x128xf32>
    %40 = vector.extract_strided_slice %1 {offsets = [5, 0], sizes = [1, 32], strides = [1, 1]} : vector<8x32xf32> to vector<1x32xf32>
    %41 = vector.shape_cast %40 : vector<1x32xf32> to vector<32xf32>
    %42 = vector.shape_cast %41 : vector<32xf32> to vector<32x1xf32>
    %43 = vector.broadcast %42 : vector<32x1xf32> to vector<32x128xf32>
    %44 = arith.addf %3, %43 : vector<32x128xf32>
    %45 = math.tanh %44 : vector<32x128xf32>
    %cst_11 = arith.constant dense<0.000000e+00> : vector<1x128xf32>
    %46 = tpu.matmul %4, %45, %cst_11 {dimension_numbers = #tpu.dot_dimension_numbers<[1], [0], [0], [1], [0, 0, 1, 1], [], []>} : vector<1x32xf32>, vector<32x128xf32>, vector<1x128xf32> -> vector<1x128xf32>
    %47 = vector.extract_strided_slice %1 {offsets = [6, 0], sizes = [1, 32], strides = [1, 1]} : vector<8x32xf32> to vector<1x32xf32>
    %48 = vector.shape_cast %47 : vector<1x32xf32> to vector<32xf32>
    %49 = vector.shape_cast %48 : vector<32xf32> to vector<32x1xf32>
    %50 = vector.broadcast %49 : vector<32x1xf32> to vector<32x128xf32>
    %51 = arith.addf %3, %50 : vector<32x128xf32>
    %52 = math.tanh %51 : vector<32x128xf32>
    %cst_12 = arith.constant dense<0.000000e+00> : vector<1x128xf32>
    %53 = tpu.matmul %4, %52, %cst_12 {dimension_numbers = #tpu.dot_dimension_numbers<[1], [0], [0], [1], [0, 0, 1, 1], [], []>} : vector<1x32xf32>, vector<32x128xf32>, vector<1x128xf32> -> vector<1x128xf32>
    %54 = vector.extract_strided_slice %1 {offsets = [7, 0], sizes = [1, 32], strides = [1, 1]} : vector<8x32xf32> to vector<1x32xf32>
    %55 = vector.shape_cast %54 : vector<1x32xf32> to vector<32xf32>
    %56 = vector.shape_cast %55 : vector<32xf32> to vector<32x1xf32>
    %57 = vector.broadcast %56 : vector<32x1xf32> to vector<32x128xf32>
    %58 = arith.addf %3, %57 : vector<32x128xf32>
    %59 = math.tanh %58 : vector<32x128xf32>
    %cst_13 = arith.constant dense<0.000000e+00> : vector<1x128xf32>
    %60 = tpu.matmul %4, %59, %cst_13 {dimension_numbers = #tpu.dot_dimension_numbers<[1], [0], [0], [1], [0, 0, 1, 1], [], []>} : vector<1x32xf32>, vector<32x128xf32>, vector<1x128xf32> -> vector<1x128xf32>
    %61 = tpu.concatenate %11, %18, %25, %32, %39, %46, %53, %60 in 0 : vector<1x128xf32>, vector<1x128xf32>, vector<1x128xf32>, vector<1x128xf32>, vector<1x128xf32>, vector<1x128xf32>, vector<1x128xf32>, vector<1x128xf32> -> vector<8x128xf32>
    %c0_14 = arith.constant 0 : index
    %c0_15 = arith.constant 0 : index
    %62 = vector.load %arg7[%c0_14, %c0_15] : memref<1x1xf32, #tpu.memory_space<vmem>>, vector<1x1xf32>
    %63 = vector.broadcast %62 : vector<1x1xf32> to vector<8x128xf32>
    %64 = arith.addf %61, %63 : vector<8x128xf32>
    %c0_16 = arith.constant 0 : index
    %c0_17 = arith.constant 0 : index
    %c0_18 = arith.constant 0 : index
    %65 = vector.load %arg4[%c0_16, %c0_17, %c0_18] : memref<1x1x128xf32, #tpu.memory_space<vmem>>, vector<1x1x128xf32>
    %66 = vector.shape_cast %65 : vector<1x1x128xf32> to vector<1x128xf32>
    %cst_19 = arith.constant 0.000000e+00 : f32
    %67 = vector.broadcast %cst_19 : f32 to vector<1x128xf32>
    %68 = arith.cmpf ogt, %66, %67 : vector<1x128xf32>
    %cst_20 = arith.constant 0xFF800000 : f32
    %69 = vector.shape_cast %68 : vector<1x128xi1> to vector<1x128xi1>
    %70 = vector.broadcast %69 : vector<1x128xi1> to vector<8x128xi1>
    %71 = vector.broadcast %cst_20 : f32 to vector<8x128xf32>
    %72 = arith.select %70, %64, %71 : vector<8x128xi1>, vector<8x128xf32>
    %cst_21 = arith.constant dense<0xFF800000> : vector<8xf32>
    %73 = vector.multi_reduction <maximumf>, %72, %cst_21 [1] : vector<8x128xf32> to vector<8xf32>
    %74 = vector.shape_cast %73 : vector<8xf32> to vector<8x1xf32>
    %cst_22 = arith.constant 0.000000e+00 : f32
    %75 = vector.broadcast %cst_22 : f32 to vector<8x1xf32>
    %76 = arith.maximumf %74, %75 : vector<8x1xf32>
    %77 = vector.broadcast %76 : vector<8x1xf32> to vector<8x128xf32>
    %78 = arith.subf %64, %77 : vector<8x128xf32>
    %79 = math.exp %78 : vector<8x128xf32>
    %cst_23 = arith.constant 0.000000e+00 : f32
    %80 = vector.shape_cast %68 : vector<1x128xi1> to vector<1x128xi1>
    %81 = vector.broadcast %80 : vector<1x128xi1> to vector<8x128xi1>
    %82 = vector.broadcast %cst_23 : f32 to vector<8x128xf32>
    %83 = arith.select %81, %79, %82 : vector<8x128xi1>, vector<8x128xf32>
    %cst_24 = arith.constant dense<0.000000e+00> : vector<8xf32>
    %84 = vector.multi_reduction <add>, %83, %cst_24 [1] : vector<8x128xf32> to vector<8xf32>
    %85 = vector.shape_cast %84 : vector<8xf32> to vector<8x1xf32>
    %cst_25 = arith.constant 0.000000e+00 : f32
    %86 = vector.broadcast %cst_25 : f32 to vector<8x1xf32>
    %87 = arith.subf %86, %76 : vector<8x1xf32>
    %88 = math.exp %87 : vector<8x1xf32>
    %cst_26 = arith.constant 9.99999974E-6 : f32
    %89 = vector.broadcast %cst_26 : f32 to vector<8x1xf32>
    %90 = arith.mulf %89, %88 : vector<8x1xf32>
    %91 = arith.addf %85, %90 : vector<8x1xf32>
    %cst_27 = arith.constant 1.000000e+00 : f32
    %92 = vector.broadcast %cst_27 : f32 to vector<8x1xf32>
    %93 = arith.divf %92, %91 : vector<8x1xf32>
    %94 = vector.broadcast %93 : vector<8x1xf32> to vector<8x128xf32>
    %95 = arith.mulf %83, %94 : vector<8x128xf32>
    %c0_28 = arith.constant 0 : index
    %c0_29 = arith.constant 0 : index
    %c0_30 = arith.constant 0 : index
    %96 = vector.load %arg9[%c0_28, %c0_29, %c0_30] : memref<1x8x128xf32, #tpu.memory_space<vmem>>, vector<1x8x128xf32>
    %97 = vector.shape_cast %96 : vector<1x8x128xf32> to vector<8x128xf32>
    %98 = vector.shape_cast %95 : vector<8x128xf32> to vector<1x8x128xf32>
    tpu.vector_store %arg9[%c0_28, %c0_29, %c0_30], %98 {strides = array<i32>} : memref<1x8x128xf32, #tpu.memory_space<vmem>>, vector<1x8x128xf32>,
    %c0_31 = arith.constant 0 : index
    %c0_32 = arith.constant 0 : index
    %c0_33 = arith.constant 0 : index
    %99 = vector.load %arg5[%c0_31, %c0_32, %c0_33] : memref<1x128x32xf32, #tpu.memory_space<vmem>>, vector<1x128x32xf32>
    %100 = vector.shape_cast %99 : vector<1x128x32xf32> to vector<128x32xf32>
    %cst_34 = arith.constant dense<0.000000e+00> : vector<8x32xf32>
    %101 = tpu.matmul %95, %100, %cst_34 {dimension_numbers = #tpu.dot_dimension_numbers<[1], [0], [0], [1], [0, 0, 1, 1], [], []>} : vector<8x128xf32>, vector<128x32xf32>, vector<8x32xf32> -> vector<8x32xf32>
    %c0_35 = arith.constant 0 : index
    %c0_36 = arith.constant 0 : index
    %c0_37 = arith.constant 0 : index
    %102 = vector.load %arg8[%c0_35, %c0_36, %c0_37] : memref<1x8x32xf32, #tpu.memory_space<vmem>>, vector<1x8x32xf32>
    %103 = vector.shape_cast %102 : vector<1x8x32xf32> to vector<8x32xf32>
    %104 = vector.shape_cast %101 : vector<8x32xf32> to vector<1x8x32xf32>
    tpu.vector_store %arg8[%c0_35, %c0_36, %c0_37], %104 {strides = array<i32>} : memref<1x8x32xf32, #tpu.memory_space<vmem>>, vector<1x8x32xf32>,
    return
  }
  func.func @transform_0(%arg0: i32, %arg1: i32) -> (i32, i32, i32) {
    %c0_i32 = arith.constant 0 : i32
    %c0_i32_0 = arith.constant 0 : i32
    return %arg0, %arg1, %c0_i32 : i32, i32, i32
  }
  func.func @transform_1(%arg0: i32, %arg1: i32) -> (i32, i32, i32) {
    %c0_i32 = arith.constant 0 : i32
    %c0_i32_0 = arith.constant 0 : i32
    %c0_i32_1 = arith.constant 0 : i32
    return %arg0, %c0_i32, %c0_i32_0 : i32, i32, i32
  }
  func.func @transform_2(%arg0: i32, %arg1: i32) -> (i32, i32, i32) {
    %c0_i32 = arith.constant 0 : i32
    %c0_i32_0 = arith.constant 0 : i32
    %c0_i32_1 = arith.constant 0 : i32
    return %arg0, %c0_i32, %c0_i32_0 : i32, i32, i32
  }
  func.func @transform_3(%arg0: i32, %arg1: i32) -> (i32, i32, i32) {
    %c0_i32 = arith.constant 0 : i32
    %c0_i32_0 = arith.constant 0 : i32
    %c0_i32_1 = arith.constant 0 : i32
    return %arg0, %c0_i32, %c0_i32_0 : i32, i32, i32
  }
  func.func @transform_4(%arg0: i32, %arg1: i32) -> (i32, i32) {
    %c0_i32 = arith.constant 0 : i32
    %c0_i32_0 = arith.constant 0 : i32
    %c0_i32_1 = arith.constant 0 : i32
    return %c0_i32, %c0_i32_0 : i32, i32
  }
  func.func @transform_5(%arg0: i32, %arg1: i32) -> (i32, i32) {
    %c0_i32 = arith.constant 0 : i32
    %c0_i32_0 = arith.constant 0 : i32
    %c0_i32_1 = arith.constant 0 : i32
    return %c0_i32, %c0_i32_0 : i32, i32
  }
  func.func @transform_6(%arg0: i32, %arg1: i32) -> (i32, i32, i32) {
    %c0_i32 = arith.constant 0 : i32
    %c0_i32_0 = arith.constant 0 : i32
    return %arg0, %arg1, %c0_i32 : i32, i32, i32
  }
  func.func @transform_7(%arg0: i32, %arg1: i32) -> (i32, i32, i32) {
    %c0_i32 = arith.constant 0 : i32
    %c0_i32_0 = arith.constant 0 : i32
    return %arg0, %arg1, %c0_i32 : i32, i32, i32
  }
}

</mosaic_0001>

<llo_original>
// kernel: tpu_custom_call.1
$region0: #{tpu_custom_call.1}
  #allocation0 [shape = 'u32[]', space=smem, size = 0x4, offset = 0x4, fixed_abs, tag = 'smem constant byte address 0x4 - core index']
  #allocation1 [shape = 'u32[144,128]{1,0:T(1,128)}', space=vmem, size = 0x12000, scoped, tag = 'internal scratch']
  #allocation2 [shape = 'f32[1,1]{1,0:T(1,128)S(1)}', space=vmem, size = 0x200, scoped, tag = 'scoped memory for tpu_custom_call.1']
  %s0 = inlined_call_operand.vmem [shape: f32[2,16,32], index: 0, kind: input, shape index: {}]
  %s1 = inlined_call_operand.vmem [shape: f32[2,32,128], index: 1, kind: input, shape index: {}]
  %s2 = inlined_call_operand.vmem [shape: f32[2,1,128], index: 2, kind: input, shape index: {}]
  %s3 = inlined_call_operand.vmem [shape: f32[2,128,32], index: 3, kind: input, shape index: {}]
  %s4 = inlined_call_operand.vmem [shape: f32[1,32], index: 4, kind: input, shape index: {}]
  %s5 = inlined_call_operand.<no memory space> [shape: f32[1,1], index: 5, kind: input, shape index: {}]
  %s6 = inlined_call_operand.hbm [shape: f32[2,16,32], index: 6, kind: output, shape index: {0}]
  %s7 = inlined_call_operand.hbm [shape: f32[2,16,128], index: 7, kind: output, shape index: {1}]
  %8 = xla_tuple %s6, %s7
  %s9 = sld [smem:[#allocation0]]
  $region65: #{tpu_custom_call.1} parent=0
    _
  %s11 = ssub.s32 1, %s9
  %s12 = scalar_select 0, %s11, %s9
  %v13 = vstv %s5
  %14 = vst [vmem:[#allocation2] sm:$0x1] %v13
  $region1: #{tpu_custom_call.1} parent=0
    #allocation3 [shape = 'u8[8192]{0}', space=vmem, size = 0x2000, scoped, tag = 'output window, operand 0']
    #allocation4 [shape = 's32[2]{0}', space=sflag, size = 0x8, scoped, tag = 'scoped memory for tpu_custom_call.1']
    #allocation5 [shape = 'u8[8192]{0}', space=vmem, size = 0x2000, scoped, tag = 'output window, operand 1']
    #allocation6 [shape = 's32[2]{0}', space=sflag, size = 0x8, scoped, tag = 'scoped memory for tpu_custom_call.1']
    %15 = vsyncpa [#allocation4], 0
    %s16 = scalar_lea.sflag [#allocation4], 1
    %17 = vsyncpa %s16, 0
    %18 = vsyncpa [#allocation6], 0
    %s19 = scalar_lea.sflag [#allocation6], 1
    %20 = vsyncpa %s19, 0
    loop: start=0, step=1, limit=6
    $region2: #{tpu_custom_call.1} parent=1 // loop_pre_header
      _
    $region3: #{tpu_custom_call.1} parent=1 // loop_header
      %s22 = sphi 0, %s26
      %p23 = scmp.ge.s32.totalorder %s22, 6
      %s29 = sphi 0, %s41
      %s30 = sphi 0, %s37
      %s31 = sphi 0, %s29
      %s32 = sphi 0, %s30
      %s33 = sphi 0, %s31
      %s34 = sphi 0, %s32
      %s46 = sphi 0, %s48
      %s49 = sphi 0, %s46
      %s50 = sphi 0, %s49
      %s66 = sphi 0, %s50
      %s72 = sphi 0, %s74
      %s75 = sphi 0, %s72
      %s76 = sphi 0, %s75
      %s92 = sphi 0, %s76
      %s98 = sphi 0, %s100
      %s101 = sphi 0, %s98
      %s102 = sphi 0, %s101
      %s118 = sphi 0, %s102
      %s124 = sphi 0, %s126
      %s127 = sphi 0, %s124
      %s128 = sphi 0, %s127
      %s144 = sphi 0, %s128
      %s148 = sphi 0, %s148
      %s150 = sphi 0, %s148
      %s151 = sphi 0, %s150
      %s165 = sphi 0, %s151
      %s169 = sphi 0, %s169
      %s171 = sphi 0, %s169
      %s172 = sphi 0, %s171
      %s186 = sphi 0, %s172
      %s194 = sphi 0, %s196
      %s197 = sphi 0, %s194
      %s198 = sphi 0, %s197
      %s214 = sphi 0, %s198
      %s222 = sphi 0, %s224
      %s225 = sphi 0, %s222
      %s226 = sphi 0, %s225
      %s242 = sphi 0, %s226
    $region4: #{tpu_custom_call.1} parent=1 // loop_header_branch
      %25 = sbr.rel (%p23) target = $region8
    $region5: #{tpu_custom_call.1} parent=1 // loop_body
      %s27 = ssub.s32 %s22, 1
      %s28 = ssub.s32 %s22, 2
      %s35 = sadd.s32 1, %s30
      %p36 = scmp.ge.s32.totalorder %s35, 2
      %s37 = scalar_select %p36, 0, %s35
      %s38 = sadd.s32 1, %s29
      %s39 = scalar_select %p36, %s38, %s29
      %p40 = scmp.ge.s32.totalorder %s39, 2
      %s41 = scalar_select %p40, 0, %s39
      %s42 = ssub.s32 %s29, %s41
      %s43 = ssub.s32 %s30, %s37
      %s44 = sor.u32 %s42, %s43
      %p45 = scmp.eq.s32.totalorder %s44, 0
      %s47 = sadd.s32 %s46, 1
      %s48 = scalar_select %p45, %s46, %s47
      %p51 = pneg %p45
      %p52 = scmp.eq.s32.totalorder %s22, 3
      %p53 = por %p51, %p52
      %p54 = scmp.ne.s32.totalorder %s46, %s49
      %p55 = scmp.eq.s32.totalorder %s22, 0
      %p56 = por %p54, %p55
      %p57 = scmp.ne.s32.totalorder %s46, %s49
      %p58 = scmp.eq.s32.totalorder %s27, 3
      %p59 = por %p57, %p58
      %p60 = scmp.ne.s32.totalorder %s49, %s50
      %p61 = scmp.eq.s32.totalorder %s27, 0
      %p62 = por %p60, %p61
      %p63 = scmp.ne.s32.totalorder %s49, %s50
      %p64 = scmp.eq.s32.totalorder %s28, 3
      %p65 = por %p63, %p64
      %p67 = scmp.ne.s32.totalorder %s50, %s66
      %p68 = scmp.eq.s32.totalorder %s28, 0
      %p69 = por %p67, %p68
      %s70 = ssub.s32 %s29, %s41
      %p71 = scmp.eq.s32.totalorder %s70, 0
      %s73 = sadd.s32 %s72, 1
      %s74 = scalar_select %p71, %s72, %s73
      %p77 = pneg %p71
      %p78 = scmp.eq.s32.totalorder %s22, 3
      %p79 = por %p77, %p78
      %p80 = scmp.ne.s32.totalorder %s72, %s75
      %p81 = scmp.eq.s32.totalorder %s22, 0
      %p82 = por %p80, %p81
      %p83 = scmp.ne.s32.totalorder %s72, %s75
      %p84 = scmp.eq.s32.totalorder %s27, 3
      %p85 = por %p83, %p84
      %p86 = scmp.ne.s32.totalorder %s75, %s76
      %p87 = scmp.eq.s32.totalorder %s27, 0
      %p88 = por %p86, %p87
      %p89 = scmp.ne.s32.totalorder %s75, %s76
      %p90 = scmp.eq.s32.totalorder %s28, 3
      %p91 = por %p89, %p90
      %p93 = scmp.ne.s32.totalorder %s76, %s92
      %p94 = scmp.eq.s32.totalorder %s28, 0
      %p95 = por %p93, %p94
      %s96 = ssub.s32 %s29, %s41
      %p97 = scmp.eq.s32.totalorder %s96, 0
      %s99 = sadd.s32 %s98, 1
      %s100 = scalar_select %p97, %s98, %s99
      %p103 = pneg %p97
      %p104 = scmp.eq.s32.totalorder %s22, 3
      %p105 = por %p103, %p104
      %p106 = scmp.ne.s32.totalorder %s98, %s101
      %p107 = scmp.eq.s32.totalorder %s22, 0
      %p108 = por %p106, %p107
      %p109 = scmp.ne.s32.totalorder %s98, %s101
      %p110 = scmp.eq.s32.totalorder %s27, 3
      %p111 = por %p109, %p110
      %p112 = scmp.ne.s32.totalorder %s101, %s102
      %p113 = scmp.eq.s32.totalorder %s27, 0
      %p114 = por %p112, %p113
      %p115 = scmp.ne.s32.totalorder %s101, %s102
      %p116 = scmp.eq.s32.totalorder %s28, 3
      %p117 = por %p115, %p116
      %p119 = scmp.ne.s32.totalorder %s102, %s118
      %p120 = scmp.eq.s32.totalorder %s28, 0
      %p121 = por %p119, %p120
      %s122 = ssub.s32 %s29, %s41
      %p123 = scmp.eq.s32.totalorder %s122, 0
      %s125 = sadd.s32 %s124, 1
      %s126 = scalar_select %p123, %s124, %s125
      %p129 = pneg %p123
      %p130 = scmp.eq.s32.totalorder %s22, 3
      %p131 = por %p129, %p130
      %p132 = scmp.ne.s32.totalorder %s124, %s127
      %p133 = scmp.eq.s32.totalorder %s22, 0
      %p134 = por %p132, %p133
      %p135 = scmp.ne.s32.totalorder %s124, %s127
      %p136 = scmp.eq.s32.totalorder %s27, 3
      %p137 = por %p135, %p136
      %p138 = scmp.ne.s32.totalorder %s127, %s128
      %p139 = scmp.eq.s32.totalorder %s27, 0
      %p140 = por %p138, %p139
      %p141 = scmp.ne.s32.totalorder %s127, %s128
      %p142 = scmp.eq.s32.totalorder %s28, 3
      %p143 = por %p141, %p142
      %p145 = scmp.ne.s32.totalorder %s128, %s144
      %p146 = scmp.eq.s32.totalorder %s28, 0
      %p147 = por %p145, %p146
      %s149 = sadd.s32 %s148, 1
      %p152 = scmp.eq.s32.totalorder %s22, 3
      %p153 = scmp.ne.s32.totalorder %s148, %s150
      %p154 = scmp.eq.s32.totalorder %s22, 0
      %p155 = por %p153, %p154
      %p156 = scmp.ne.s32.totalorder %s148, %s150
      %p157 = scmp.eq.s32.totalorder %s27, 3
      %p158 = por %p156, %p157
      %p159 = scmp.ne.s32.totalorder %s150, %s151
      %p160 = scmp.eq.s32.totalorder %s27, 0
      %p161 = por %p159, %p160
      %p162 = scmp.ne.s32.totalorder %s150, %s151
      %p163 = scmp.eq.s32.totalorder %s28, 3
      %p164 = por %p162, %p163
      %p166 = scmp.ne.s32.totalorder %s151, %s165
      %p167 = scmp.eq.s32.totalorder %s28, 0
      %p168 = por %p166, %p167
      %s170 = sadd.s32 %s169, 1
      %p173 = scmp.eq.s32.totalorder %s22, 3
      %p174 = scmp.ne.s32.totalorder %s169, %s171
      %p175 = scmp.eq.s32.totalorder %s22, 0
      %p176 = por %p174, %p175
      %p177 = scmp.ne.s32.totalorder %s169, %s171
      %p178 = scmp.eq.s32.totalorder %s27, 3
      %p179 = por %p177, %p178
      %p180 = scmp.ne.s32.totalorder %s171, %s172
      %p181 = scmp.eq.s32.totalorder %s27, 0
      %p182 = por %p180, %p181
      %p183 = scmp.ne.s32.totalorder %s171, %s172
      %p184 = scmp.eq.s32.totalorder %s28, 3
      %p185 = por %p183, %p184
      %p187 = scmp.ne.s32.totalorder %s172, %s186
      %p188 = scmp.eq.s32.totalorder %s28, 0
      %p189 = por %p187, %p188
      %s190 = ssub.s32 %s29, %s41
      %s191 = ssub.s32 %s30, %s37
      %s192 = sor.u32 %s190, %s191
      %p193 = scmp.eq.s32.totalorder %s192, 0
      %s195 = sadd.s32 %s194, 1
      %s196 = scalar_select %p193, %s194, %s195
      %p199 = pneg %p193
      %p200 = scmp.eq.s32.totalorder %s22, 3
      %p201 = por %p199, %p200
      %p202 = scmp.ne.s32.totalorder %s194, %s197
      %p203 = scmp.eq.s32.totalorder %s22, 0
      %p204 = por %p202, %p203
      %p205 = scmp.ne.s32.totalorder %s194, %s197
      %p206 = scmp.eq.s32.totalorder %s27, 3
      %p207 = por %p205, %p206
      %p208 = scmp.ne.s32.totalorder %s197, %s198
      %p209 = scmp.eq.s32.totalorder %s27, 0
      %p210 = por %p208, %p209
      %p211 = scmp.ne.s32.totalorder %s197, %s198
      %p212 = scmp.eq.s32.totalorder %s28, 3
      %p213 = por %p211, %p212
      %p215 = scmp.ne.s32.totalorder %s198, %s214
      %p216 = scmp.eq.s32.totalorder %s28, 0
      %p217 = por %p215, %p216
      %s218 = ssub.s32 %s29, %s41
      %s219 = ssub.s32 %s30, %s37
      %s220 = sor.u32 %s218, %s219
      %p221 = scmp.eq.s32.totalorder %s220, 0
      %s223 = sadd.s32 %s222, 1
      %s224 = scalar_select %p221, %s222, %s223
      %p227 = pneg %p221
      %p228 = scmp.eq.s32.totalorder %s22, 3
      %p229 = por %p227, %p228
      %p230 = scmp.ne.s32.totalorder %s222, %s225
      %p231 = scmp.eq.s32.totalorder %s22, 0
      %p232 = por %p230, %p231
      %p233 = scmp.ne.s32.totalorder %s222, %s225
      %p234 = scmp.eq.s32.totalorder %s27, 3
      %p235 = por %p233, %p234
      %p236 = scmp.ne.s32.totalorder %s225, %s226
      %p237 = scmp.eq.s32.totalorder %s27, 0
      %p238 = por %p236, %p237
      %p239 = scmp.ne.s32.totalorder %s225, %s226
      %p240 = scmp.eq.s32.totalorder %s28, 3
      %p241 = por %p239, %p240
      %p243 = scmp.ne.s32.totalorder %s226, %s242
      %p244 = scmp.eq.s32.totalorder %s28, 0
      %p245 = por %p243, %p244
      %p246 = scmp.le.s32.totalorder 1, %s22
      %p247 = scmp.lt.s32.totalorder %s22, 5
      %p248 = pnand %p246, %p247
      %p249 = pneg %p248
      // Predicated region
      $region9: #{tpu_custom_call.1} parent=5 // pred_check
        _
      $region10: #{tpu_custom_call.1} parent=5 // pred_check_branch
        %251 = sbr.rel (%p248) target = $region12
      $region11: #{tpu_custom_call.1} parent=5 // pred_region
        %s252 = ssub.s32 %s22, 1
        // Predicated region
        $region13: #{tpu_custom_call.1} parent=11 // pred_check
          %p253 = pneg %p161
        $region14: #{tpu_custom_call.1} parent=11 // pred_check_branch
          %255 = sbr.rel (%p253) target = $region16
        $region15: #{tpu_custom_call.1} parent=11 // pred_region
          _
        $region16: #{tpu_custom_call.1} parent=11 // pred_fallthru
          _
        // Predicated region
        $region17: #{tpu_custom_call.1} parent=11 // pred_check
          %p256 = pneg %p182
        $region18: #{tpu_custom_call.1} parent=11 // pred_check_branch
          %258 = sbr.rel (%p256) target = $region20
        $region19: #{tpu_custom_call.1} parent=11 // pred_region
          _
        $region20: #{tpu_custom_call.1} parent=11 // pred_fallthru
          _
      $region12: #{tpu_custom_call.1} parent=5 // pred_fallthru
        _
      %p259 = scmp.lt.s32.totalorder %s22, 4
      // Predicated region
      $region21: #{tpu_custom_call.1} parent=5 // pred_check
        %p260 = pneg %p259
      $region22: #{tpu_custom_call.1} parent=5 // pred_check_branch
        %262 = sbr.rel (%p260) target = $region24
      $region23: #{tpu_custom_call.1} parent=5 // pred_region
        // Predicated region
        $region25: #{tpu_custom_call.1} parent=23 // pred_check
          %p263 = pneg %p56
        $region26: #{tpu_custom_call.1} parent=23 // pred_check_branch
          %265 = sbr.rel (%p263) target = $region28
        $region27: #{tpu_custom_call.1} parent=23 // pred_region
          %p266 = scmp.lt.s32.totalorder %s29, 1
          %s267 = scalar_select %p266, %s29, 1
          %p268 = scmp.lt.s32.totalorder %s30, 1
          %s269 = scalar_select %p268, %s30, 1
          %s270 = smul.addr %s267, 2
          %s271 = sadd.s32 %s269, %s270
          %s272 = smul.addr %s271, 8
          %s273 = scalar_lea.vmem %s0, %s272
        $region28: #{tpu_custom_call.1} parent=23 // pred_fallthru
          _
        // Predicated region
        $region29: #{tpu_custom_call.1} parent=23 // pred_check
          %p274 = pneg %p82
        $region30: #{tpu_custom_call.1} parent=23 // pred_check_branch
          %276 = sbr.rel (%p274) target = $region32
        $region31: #{tpu_custom_call.1} parent=23 // pred_region
          %p277 = scmp.lt.s32.totalorder %s29, 1
          %s278 = scalar_select %p277, %s29, 1
          %s279 = smul.addr %s278, 4
          %s280 = smul.addr %s279, 8
          %s281 = scalar_lea.vmem %s1, %s280
        $region32: #{tpu_custom_call.1} parent=23 // pred_fallthru
          _
        // Predicated region
        $region33: #{tpu_custom_call.1} parent=23 // pred_check
          %p282 = pneg %p108
        $region34: #{tpu_custom_call.1} parent=23 // pred_check_branch
          %284 = sbr.rel (%p282) target = $region36
        $region35: #{tpu_custom_call.1} parent=23 // pred_region
          %p285 = scmp.lt.s32.totalorder %s29, 1
          %s286 = scalar_select %p285, %s29, 1
          %s287 = scalar_lea.vmem %s2, %s286
        $region36: #{tpu_custom_call.1} parent=23 // pred_fallthru
          _
        // Predicated region
        $region37: #{tpu_custom_call.1} parent=23 // pred_check
          %p288 = pneg %p134
        $region38: #{tpu_custom_call.1} parent=23 // pred_check_branch
          %290 = sbr.rel (%p288) target = $region40
        $region39: #{tpu_custom_call.1} parent=23 // pred_region
          %p291 = scmp.lt.s32.totalorder %s29, 1
          %s292 = scalar_select %p291, %s29, 1
          %s293 = smul.addr %s292, 16
          %s294 = smul.addr %s293, 8
          %s295 = scalar_lea.vmem %s3, %s294
        $region40: #{tpu_custom_call.1} parent=23 // pred_fallthru
          _
      $region24: #{tpu_custom_call.1} parent=5 // pred_fallthru
        _
      %p296 = scmp.le.s32.totalorder 1, %s22
      %p297 = scmp.lt.s32.totalorder %s22, 5
      %p298 = pnand %p296, %p297
      %p299 = pneg %p298
      // Predicated region
      $region41: #{tpu_custom_call.1} parent=5 // pred_check
        _
      $region42: #{tpu_custom_call.1} parent=5 // pred_check_branch
        %301 = sbr.rel (%p298) target = $region44
      $region43: #{tpu_custom_call.1} parent=5 // pred_region
        %s302 = ssub.s32 %s22, 1
        %p303 = scmp.lt.s32.totalorder %s31, 1
        %s304 = scalar_select %p303, %s31, 1
        %p305 = scmp.lt.s32.totalorder %s32, 1
        %s306 = scalar_select %p305, %s32, 1
        %s307 = smul.addr %s304, 2
        %s308 = sadd.s32 %s306, %s307
        %s309 = smul.addr %s308, 8
        %s310 = scalar_lea.vmem %s0, %s309
        %p311 = pneg %p62
        %p312 = pneg %p59
        %p313 = scmp.lt.s32.totalorder %s31, 1
        %s314 = scalar_select %p313, %s31, 1
        %s315 = smul.addr %s314, 4
        %s316 = smul.addr %s315, 8
        %s317 = scalar_lea.vmem %s1, %s316
        %p318 = pneg %p88
        %p319 = pneg %p85
        %p320 = scmp.lt.s32.totalorder %s31, 1
        %s321 = scalar_select %p320, %s31, 1
        %s322 = scalar_lea.vmem %s2, %s321
        %p323 = pneg %p114
        %p324 = pneg %p111
        %p325 = scmp.lt.s32.totalorder %s31, 1
        %s326 = scalar_select %p325, %s31, 1
        %s327 = smul.addr %s326, 16
        %s328 = smul.addr %s327, 8
        %s329 = scalar_lea.vmem %s3, %s328
        %p330 = pneg %p140
        %p331 = pneg %p137
        %p332 = pneg %p161
        %p333 = pneg %p158
        %p334 = pneg %p182
        %p335 = pneg %p179
        %p336 = pneg %p210
        %p337 = pneg %p207
        %s338 = sand.u32 %s197, 1
        %s339 = scalar_lea.sflag [#allocation4], %s338
        %s340 = sand.u32 %s197, 1
        %s341 = smul.addr %s340, 8
        %s342 = scalar_lea.vmem [#allocation3], %s341
        %p343 = pneg %p238
        %p344 = pneg %p235
        %s345 = sand.u32 %s225, 1
        %s346 = scalar_lea.sflag [#allocation6], %s345
        %s347 = sand.u32 %s225, 1
        %s348 = smul.addr %s347, 8
        %s349 = scalar_lea.vmem [#allocation5], %s348
        %p350 = scmp.lt.s32.totalorder %s31, 1
        %s351 = scalar_select %p350, %s31, 1
        %p352 = scmp.lt.s32.totalorder %s32, 1
        %s353 = scalar_select %p352, %s32, 1
        %s354 = smul.addr %s351, 2
        %s355 = sadd.s32 %s353, %s354
        %s356 = smul.addr %s355, 8
        %s357 = scalar_lea.vmem %s0, %s356
        %p358 = scmp.lt.s32.totalorder %s31, 1
        %s359 = scalar_select %p358, %s31, 1
        %s360 = smul.addr %s359, 4
        %s361 = smul.addr %s360, 8
        %s362 = scalar_lea.vmem %s1, %s361
        %p363 = scmp.lt.s32.totalorder %s31, 1
        %s364 = scalar_select %p363, %s31, 1
        %s365 = scalar_lea.vmem %s2, %s364
        %p366 = scmp.lt.s32.totalorder %s31, 1
        %s367 = scalar_select %p366, %s31, 1
        %s368 = smul.addr %s367, 16
        %s369 = smul.addr %s368, 8
        %s370 = scalar_lea.vmem %s3, %s369
        %v371 = vld [vmem:[%s357] sm:$0xff]
        %v372 = vld [vmem:[%s362] sm:$0xff]
        %v373 = vld [vmem:[%s362 + $0x8] sm:$0xff]
        %v374 = vld [vmem:[%s362 + $0x10] sm:$0xff]
        %v375 = vld [vmem:[%s362 + $0x18] sm:$0xff]
        %v376 = vld [vmem:[%s4] sm:$0x1]
        %v377 = vlaneseq
        %v378 = vshrl.u32 %v377, 7
        %v379 = vsub.s32 0, %v378
        %v380 = vrot.slane %v371, %v379
        %382 = vbcast.lane.b32.xlu0 %v380, 256
        %v383 = vpop.permute.xlu0 %382
        %s385 = sor.u32 256, 8
        %386 = vbcast.lane.b32.xlu0 %v380, %s385
        %v387 = vpop.permute.xlu0 %386
        %s389 = sor.u32 256, 16
        %390 = vbcast.lane.b32.xlu0 %v380, %s389
        %v391 = vpop.permute.xlu0 %390
        %s393 = sor.u32 256, 24
        %394 = vbcast.lane.b32.xlu0 %v380, %s393
        %v395 = vpop.permute.xlu0 %394
        %v396 = vadd.f32 %v372, %v383
        %v397 = vadd.f32 %v373, %v387
        %v398 = vadd.f32 %v374, %v391
        %v399 = vadd.f32 %v375, %v395
        %v400 = vtanh.pop %v396
        %v401 = vtanh.pop %v397
        %v402 = vtanh.pop %v398
        %v403 = vtanh.pop %v399
        %vm404 = vcmask 261120
        %v406 = vsel %vm404, %v376, 0
        %408 = vmatprep.subr.mxu0 0.0
        %409 = vmatpush1.msra.mxu0 %v400
        %410 = vmatprep.subr.mxu0 0.0
        %411 = vmatpush1.msra.mxu0 %v401
        %412 = vmatprep.subr.mxu0 0.0
        %413 = vmatpush1.msra.mxu0 %v402
        %414 = vmatprep.subr.mxu0 0.0
        %415 = vmatpush1.msra.mxu0 %v403
        %416 = vmatprep.subr.mxu0 0.0
        %417 = vmatpush1.msra.mxu0 0.0
        %418 = vmatprep.subr.mxu0 0.0
        %419 = vmatpush1.msra.mxu0 0.0
        %420 = vmatprep.subr.mxu0 0.0
        %421 = vmatpush1.msra.mxu0 0.0
        %422 = vmatprep.subr.mxu0 0.0
        %423 = vmatpush1.msra.mxu0 0.0
        %424 = vmatprep.subr.mxu0 0.0
        %425 = vmatpush1.msra.mxu0 0.0
        %426 = vmatprep.subr.mxu0 0.0
        %427 = vmatpush1.msra.mxu0 0.0
        %428 = vmatprep.subr.mxu0 0.0
        %429 = vmatpush1.msra.mxu0 0.0
        %430 = vmatprep.subr.mxu0 0.0
        %431 = vmatpush1.msra.mxu0 0.0
        %432 = vmatprep.subr.mxu0 0.0
        %433 = vmatpush1.msra.mxu0 0.0
        %434 = vmatprep.subr.mxu0 0.0
        %435 = vmatpush1.msra.mxu0 0.0
        %436 = vmatprep.subr.mxu0 0.0
        %437 = vmatpush1.msra.mxu0 0.0
        %438 = vmatprep.subr.mxu0 0.0
        %439 = vmatpush1.msra.mxu0 0.0
        %440 = vmatprep.subr.mxu0 0.0
        %441 = vmatpush1.msra.mxu0 0.0
        %442 = vmatprep.subr.mxu0 0.0
        %443 = vmatpush1.msra.mxu0 0.0
        %444 = vmatprep.subr.mxu0 0.0
        %445 = vmatpush1.msra.mxu0 0.0
        %446 = vmatprep.subr.mxu0 0.0
        %447 = vmatpush1.msra.mxu0 0.0
        %448 = vmatprep.subr.mxu0 0.0
        %449 = vmatpush1.msra.mxu0 0.0
        %450 = vmatprep.subr.mxu0 0.0
        %451 = vmatpush1.msra.mxu0 0.0
        %452 = vmatprep.subr.mxu0 0.0
        %453 = vmatpush1.msra.mxu0 0.0
        %454 = vmatprep.subr.mxu0 0.0
        %455 = vmatpush1.msra.mxu0 0.0
        %456 = vmatprep.subr.mxu0 0.0
        %457 = vmatpush1.msra.mxu0 0.0
        %458 = vmatprep.subr.mxu0 0.0
        %459 = vmatpush1.msra.mxu0 0.0
        %460 = vmatprep.subr.mxu0 0.0
        %461 = vmatpush1.msra.mxu0 0.0
        %462 = vmatprep.subr.mxu0 0.0
        %463 = vmatpush1.msra.mxu0 0.0
        %464 = vmatprep.subr.mxu0 0.0
        %465 = vmatpush1.msra.mxu0 0.0
        %466 = vmatprep.subr.mxu0 0.0
        %467 = vmatpush1.msra.mxu0 0.0
        %468 = vmatprep.subr.mxu0 0.0
        %469 = vmatpush1.msra.mxu0 0.0
        %470 = vmatprep.subr.mxu0 0.0
        %471 = vmatpush1.msra.mxu0 0.0
        %472 = vmatprep.mubr.f32.mxu0 0.0
        %473 = vmatmul.mubr.f32.gmra.mrb[0].mxu0 %v406
        %v474 = vpop.f32.mrb[0].mxu0
        %v475 = vadd.f32 0.0, %v474
        %v476 = vpop.f32.mrb[0].mxu0
        %477 = vdwg.mxu0
        %v478 = vlaneseq
        %v479 = vshrl.u32 %v478, 7
        %v480 = vsub.s32 1, %v479
        %v481 = vrot.slane %v371, %v480
        %483 = vbcast.lane.b32.xlu0 %v481, 256
        %v484 = vpop.permute.xlu0 %483
        %s486 = sor.u32 256, 8
        %487 = vbcast.lane.b32.xlu0 %v481, %s486
        %v488 = vpop.permute.xlu0 %487
        %s490 = sor.u32 256, 16
        %491 = vbcast.lane.b32.xlu0 %v481, %s490
        %v492 = vpop.permute.xlu0 %491
        %s494 = sor.u32 256, 24
        %495 = vbcast.lane.b32.xlu0 %v481, %s494
        %v496 = vpop.permute.xlu0 %495
        %v497 = vadd.f32 %v372, %v484
        %v498 = vadd.f32 %v373, %v488
        %v499 = vadd.f32 %v374, %v492
        %v500 = vadd.f32 %v375, %v496
        %v501 = vtanh.pop %v497
        %v502 = vtanh.pop %v498
        %v503 = vtanh.pop %v499
        %v504 = vtanh.pop %v500
        %505 = vmatprep.subr.mxu0 0.0
        %506 = vmatpush1.msra.mxu0 %v501
        %507 = vmatprep.subr.mxu0 0.0
        %508 = vmatpush1.msra.mxu0 %v502
        %509 = vmatprep.subr.mxu0 0.0
        %510 = vmatpush1.msra.mxu0 %v503
        %511 = vmatprep.subr.mxu0 0.0
        %512 = vmatpush1.msra.mxu0 %v504
        %513 = vmatprep.subr.mxu0 0.0
        %514 = vmatpush1.msra.mxu0 0.0
        %515 = vmatprep.subr.mxu0 0.0
        %516 = vmatpush1.msra.mxu0 0.0
        %517 = vmatprep.subr.mxu0 0.0
        %518 = vmatpush1.msra.mxu0 0.0
        %519 = vmatprep.subr.mxu0 0.0
        %520 = vmatpush1.msra.mxu0 0.0
        %521 = vmatprep.subr.mxu0 0.0
        %522 = vmatpush1.msra.mxu0 0.0
        %523 = vmatprep.subr.mxu0 0.0
        %524 = vmatpush1.msra.mxu0 0.0
        %525 = vmatprep.subr.mxu0 0.0
        %526 = vmatpush1.msra.mxu0 0.0
        %527 = vmatprep.subr.mxu0 0.0
        %528 = vmatpush1.msra.mxu0 0.0
        %529 = vmatprep.subr.mxu0 0.0
        %530 = vmatpush1.msra.mxu0 0.0
        %531 = vmatprep.subr.mxu0 0.0
        %532 = vmatpush1.msra.mxu0 0.0
        %533 = vmatprep.subr.mxu0 0.0
        %534 = vmatpush1.msra.mxu0 0.0
        %535 = vmatprep.subr.mxu0 0.0
        %536 = vmatpush1.msra.mxu0 0.0
        %537 = vmatprep.subr.mxu0 0.0
        %538 = vmatpush1.msra.mxu0 0.0
        %539 = vmatprep.subr.mxu0 0.0
        %540 = vmatpush1.msra.mxu0 0.0
        %541 = vmatprep.subr.mxu0 0.0
        %542 = vmatpush1.msra.mxu0 0.0
        %543 = vmatprep.subr.mxu0 0.0
        %544 = vmatpush1.msra.mxu0 0.0
        %545 = vmatprep.subr.mxu0 0.0
        %546 = vmatpush1.msra.mxu0 0.0
        %547 = vmatprep.subr.mxu0 0.0
        %548 = vmatpush1.msra.mxu0 0.0
        %549 = vmatprep.subr.mxu0 0.0
        %550 = vmatpush1.msra.mxu0 0.0
        %551 = vmatprep.subr.mxu0 0.0
        %552 = vmatpush1.msra.mxu0 0.0
        %553 = vmatprep.subr.mxu0 0.0
        %554 = vmatpush1.msra.mxu0 0.0
        %555 = vmatprep.subr.mxu0 0.0
        %556 = vmatpush1.msra.mxu0 0.0
        %557 = vmatprep.subr.mxu0 0.0
        %558 = vmatpush1.msra.mxu0 0.0
        %559 = vmatprep.subr.mxu0 0.0
        %560 = vmatpush1.msra.mxu0 0.0
        %561 = vmatprep.subr.mxu0 0.0
        %562 = vmatpush1.msra.mxu0 0.0
        %563 = vmatprep.subr.mxu0 0.0
        %564 = vmatpush1.msra.mxu0 0.0
        %565 = vmatprep.subr.mxu0 0.0
        %566 = vmatpush1.msra.mxu0 0.0
        %567 = vmatprep.subr.mxu0 0.0
        %568 = vmatpush1.msra.mxu0 0.0
        %569 = vmatprep.mubr.f32.mxu0 0.0
        %570 = vmatmul.mubr.f32.gmra.mrb[0].mxu0 %v406
        %v571 = vpop.f32.mrb[0].mxu0
        %v572 = vadd.f32 0.0, %v571
        %v573 = vpop.f32.mrb[0].mxu0
        %574 = vdwg.mxu0
        %v575 = vlaneseq
        %v576 = vshrl.u32 %v575, 7
        %v577 = vsub.s32 2, %v576
        %v578 = vrot.slane %v371, %v577
        %580 = vbcast.lane.b32.xlu0 %v578, 256
        %v581 = vpop.permute.xlu0 %580
        %s583 = sor.u32 256, 8
        %584 = vbcast.lane.b32.xlu0 %v578, %s583
        %v585 = vpop.permute.xlu0 %584
        %s587 = sor.u32 256, 16
        %588 = vbcast.lane.b32.xlu0 %v578, %s587
        %v589 = vpop.permute.xlu0 %588
        %s591 = sor.u32 256, 24
        %592 = vbcast.lane.b32.xlu0 %v578, %s591
        %v593 = vpop.permute.xlu0 %592
        %v594 = vadd.f32 %v372, %v581
        %v595 = vadd.f32 %v373, %v585
        %v596 = vadd.f32 %v374, %v589
        %v597 = vadd.f32 %v375, %v593
        %v598 = vtanh.pop %v594
        %v599 = vtanh.pop %v595
        %v600 = vtanh.pop %v596
        %v601 = vtanh.pop %v597
        %602 = vmatprep.subr.mxu0 0.0
        %603 = vmatpush1.msra.mxu0 %v598
        %604 = vmatprep.subr.mxu0 0.0
        %605 = vmatpush1.msra.mxu0 %v599
        %606 = vmatprep.subr.mxu0 0.0
        %607 = vmatpush1.msra.mxu0 %v600
        %608 = vmatprep.subr.mxu0 0.0
        %609 = vmatpush1.msra.mxu0 %v601
        %610 = vmatprep.subr.mxu0 0.0
        %611 = vmatpush1.msra.mxu0 0.0
        %612 = vmatprep.subr.mxu0 0.0
        %613 = vmatpush1.msra.mxu0 0.0
        %614 = vmatprep.subr.mxu0 0.0
        %615 = vmatpush1.msra.mxu0 0.0
        %616 = vmatprep.subr.mxu0 0.0
        %617 = vmatpush1.msra.mxu0 0.0
        %618 = vmatprep.subr.mxu0 0.0
        %619 = vmatpush1.msra.mxu0 0.0
        %620 = vmatprep.subr.mxu0 0.0
        %621 = vmatpush1.msra.mxu0 0.0
        %622 = vmatprep.subr.mxu0 0.0
        %623 = vmatpush1.msra.mxu0 0.0
        %624 = vmatprep.subr.mxu0 0.0
        %625 = vmatpush1.msra.mxu0 0.0
        %626 = vmatprep.subr.mxu0 0.0
        %627 = vmatpush1.msra.mxu0 0.0
        %628 = vmatprep.subr.mxu0 0.0
        %629 = vmatpush1.msra.mxu0 0.0
        %630 = vmatprep.subr.mxu0 0.0
        %631 = vmatpush1.msra.mxu0 0.0
        %632 = vmatprep.subr.mxu0 0.0
        %633 = vmatpush1.msra.mxu0 0.0
        %634 = vmatprep.subr.mxu0 0.0
        %635 = vmatpush1.msra.mxu0 0.0
        %636 = vmatprep.subr.mxu0 0.0
        %637 = vmatpush1.msra.mxu0 0.0
        %638 = vmatprep.subr.mxu0 0.0
        %639 = vmatpush1.msra.mxu0 0.0
        %640 = vmatprep.subr.mxu0 0.0
        %641 = vmatpush1.msra.mxu0 0.0
        %642 = vmatprep.subr.mxu0 0.0
        %643 = vmatpush1.msra.mxu0 0.0
        %644 = vmatprep.subr.mxu0 0.0
        %645 = vmatpush1.msra.mxu0 0.0
        %646 = vmatprep.subr.mxu0 0.0
        %647 = vmatpush1.msra.mxu0 0.0
        %648 = vmatprep.subr.mxu0 0.0
        %649 = vmatpush1.msra.mxu0 0.0
        %650 = vmatprep.subr.mxu0 0.0
        %651 = vmatpush1.msra.mxu0 0.0
        %652 = vmatprep.subr.mxu0 0.0
        %653 = vmatpush1.msra.mxu0 0.0
        %654 = vmatprep.subr.mxu0 0.0
        %655 = vmatpush1.msra.mxu0 0.0
        %656 = vmatprep.subr.mxu0 0.0
        %657 = vmatpush1.msra.mxu0 0.0
        %658 = vmatprep.subr.mxu0 0.0
        %659 = vmatpush1.msra.mxu0 0.0
        %660 = vmatprep.subr.mxu0 0.0
        %661 = vmatpush1.msra.mxu0 0.0
        %662 = vmatprep.subr.mxu0 0.0
        %663 = vmatpush1.msra.mxu0 0.0
        %664 = vmatprep.subr.mxu0 0.0
        %665 = vmatpush1.msra.mxu0 0.0
        %666 = vmatprep.mubr.f32.mxu0 0.0
        %667 = vmatmul.mubr.f32.gmra.mrb[0].mxu0 %v406
        %v668 = vpop.f32.mrb[0].mxu0
        %v669 = vadd.f32 0.0, %v668
        %v670 = vpop.f32.mrb[0].mxu0
        %671 = vdwg.mxu0
        %v672 = vlaneseq
        %v673 = vshrl.u32 %v672, 7
        %v674 = vsub.s32 3, %v673
        %v675 = vrot.slane %v371, %v674
        %677 = vbcast.lane.b32.xlu0 %v675, 256
        %v678 = vpop.permute.xlu0 %677
        %s680 = sor.u32 256, 8
        %681 = vbcast.lane.b32.xlu0 %v675, %s680
        %v682 = vpop.permute.xlu0 %681
        %s684 = sor.u32 256, 16
        %685 = vbcast.lane.b32.xlu0 %v675, %s684
        %v686 = vpop.permute.xlu0 %685
        %s688 = sor.u32 256, 24
        %689 = vbcast.lane.b32.xlu0 %v675, %s688
        %v690 = vpop.permute.xlu0 %689
        %v691 = vadd.f32 %v372, %v678
        %v692 = vadd.f32 %v373, %v682
        %v693 = vadd.f32 %v374, %v686
        %v694 = vadd.f32 %v375, %v690
        %v695 = vtanh.pop %v691
        %v696 = vtanh.pop %v692
        %v697 = vtanh.pop %v693
        %v698 = vtanh.pop %v694
        %699 = vmatprep.subr.mxu0 0.0
        %700 = vmatpush1.msra.mxu0 %v695
        %701 = vmatprep.subr.mxu0 0.0
        %702 = vmatpush1.msra.mxu0 %v696
        %703 = vmatprep.subr.mxu0 0.0
        %704 = vmatpush1.msra.mxu0 %v697
        %705 = vmatprep.subr.mxu0 0.0
        %706 = vmatpush1.msra.mxu0 %v698
        %707 = vmatprep.subr.mxu0 0.0
        %708 = vmatpush1.msra.mxu0 0.0
        %709 = vmatprep.subr.mxu0 0.0
        %710 = vmatpush1.msra.mxu0 0.0
        %711 = vmatprep.subr.mxu0 0.0
        %712 = vmatpush1.msra.mxu0 0.0
        %713 = vmatprep.subr.mxu0 0.0
        %714 = vmatpush1.msra.mxu0 0.0
        %715 = vmatprep.subr.mxu0 0.0
        %716 = vmatpush1.msra.mxu0 0.0
        %717 = vmatprep.subr.mxu0 0.0
        %718 = vmatpush1.msra.mxu0 0.0
        %719 = vmatprep.subr.mxu0 0.0
        %720 = vmatpush1.msra.mxu0 0.0
        %721 = vmatprep.subr.mxu0 0.0
        %722 = vmatpush1.msra.mxu0 0.0
        %723 = vmatprep.subr.mxu0 0.0
        %724 = vmatpush1.msra.mxu0 0.0
        %725 = vmatprep.subr.mxu0 0.0
        %726 = vmatpush1.msra.mxu0 0.0
        %727 = vmatprep.subr.mxu0 0.0
        %728 = vmatpush1.msra.mxu0 0.0
        %729 = vmatprep.subr.mxu0 0.0
        %730 = vmatpush1.msra.mxu0 0.0
        %731 = vmatprep.subr.mxu0 0.0
        %732 = vmatpush1.msra.mxu0 0.0
        %733 = vmatprep.subr.mxu0 0.0
        %734 = vmatpush1.msra.mxu0 0.0
        %735 = vmatprep.subr.mxu0 0.0
        %736 = vmatpush1.msra.mxu0 0.0
        %737 = vmatprep.subr.mxu0 0.0
        %738 = vmatpush1.msra.mxu0 0.0
        %739 = vmatprep.subr.mxu0 0.0
        %740 = vmatpush1.msra.mxu0 0.0
        %741 = vmatprep.subr.mxu0 0.0
        %742 = vmatpush1.msra.mxu0 0.0
        %743 = vmatprep.subr.mxu0 0.0
        %744 = vmatpush1.msra.mxu0 0.0
        %745 = vmatprep.subr.mxu0 0.0
        %746 = vmatpush1.msra.mxu0 0.0
        %747 = vmatprep.subr.mxu0 0.0
        %748 = vmatpush1.msra.mxu0 0.0
        %749 = vmatprep.subr.mxu0 0.0
        %750 = vmatpush1.msra.mxu0 0.0
        %751 = vmatprep.subr.mxu0 0.0
        %752 = vmatpush1.msra.mxu0 0.0
        %753 = vmatprep.subr.mxu0 0.0
        %754 = vmatpush1.msra.mxu0 0.0
        %755 = vmatprep.subr.mxu0 0.0
        %756 = vmatpush1.msra.mxu0 0.0
        %757 = vmatprep.subr.mxu0 0.0
        %758 = vmatpush1.msra.mxu0 0.0
        %759 = vmatprep.subr.mxu0 0.0
        %760 = vmatpush1.msra.mxu0 0.0
        %761 = vmatprep.subr.mxu0 0.0
        %762 = vmatpush1.msra.mxu0 0.0
        %763 = vmatprep.mubr.f32.mxu0 0.0
        %764 = vmatmul.mubr.f32.gmra.mrb[0].mxu0 %v406
        %v765 = vpop.f32.mrb[0].mxu0
        %v766 = vadd.f32 0.0, %v765
        %v767 = vpop.f32.mrb[0].mxu0
        %768 = vdwg.mxu0
        %v769 = vlaneseq
        %v770 = vshrl.u32 %v769, 7
        %v771 = vsub.s32 4, %v770
        %v772 = vrot.slane %v371, %v771
        %774 = vbcast.lane.b32.xlu0 %v772, 256
        %v775 = vpop.permute.xlu0 %774
        %s777 = sor.u32 256, 8
        %778 = vbcast.lane.b32.xlu0 %v772, %s777
        %v779 = vpop.permute.xlu0 %778
        %s781 = sor.u32 256, 16
        %782 = vbcast.lane.b32.xlu0 %v772, %s781
        %v783 = vpop.permute.xlu0 %782
        %s785 = sor.u32 256, 24
        %786 = vbcast.lane.b32.xlu0 %v772, %s785
        %v787 = vpop.permute.xlu0 %786
        %v788 = vadd.f32 %v372, %v775
        %v789 = vadd.f32 %v373, %v779
        %v790 = vadd.f32 %v374, %v783
        %v791 = vadd.f32 %v375, %v787
        %v792 = vtanh.pop %v788
        %v793 = vtanh.pop %v789
        %v794 = vtanh.pop %v790
        %v795 = vtanh.pop %v791
        %796 = vmatprep.subr.mxu0 0.0
        %797 = vmatpush1.msra.mxu0 %v792
        %798 = vmatprep.subr.mxu0 0.0
        %799 = vmatpush1.msra.mxu0 %v793
        %800 = vmatprep.subr.mxu0 0.0
        %801 = vmatpush1.msra.mxu0 %v794
        %802 = vmatprep.subr.mxu0 0.0
        %803 = vmatpush1.msra.mxu0 %v795
        %804 = vmatprep.subr.mxu0 0.0
        %805 = vmatpush1.msra.mxu0 0.0
        %806 = vmatprep.subr.mxu0 0.0
        %807 = vmatpush1.msra.mxu0 0.0
        %808 = vmatprep.subr.mxu0 0.0
        %809 = vmatpush1.msra.mxu0 0.0
        %810 = vmatprep.subr.mxu0 0.0
        %811 = vmatpush1.msra.mxu0 0.0
        %812 = vmatprep.subr.mxu0 0.0
        %813 = vmatpush1.msra.mxu0 0.0
        %814 = vmatprep.subr.mxu0 0.0
        %815 = vmatpush1.msra.mxu0 0.0
        %816 = vmatprep.subr.mxu0 0.0
        %817 = vmatpush1.msra.mxu0 0.0
        %818 = vmatprep.subr.mxu0 0.0
        %819 = vmatpush1.msra.mxu0 0.0
        %820 = vmatprep.subr.mxu0 0.0
        %821 = vmatpush1.msra.mxu0 0.0
        %822 = vmatprep.subr.mxu0 0.0
        %823 = vmatpush1.msra.mxu0 0.0
        %824 = vmatprep.subr.mxu0 0.0
        %825 = vmatpush1.msra.mxu0 0.0
        %826 = vmatprep.subr.mxu0 0.0
        %827 = vmatpush1.msra.mxu0 0.0
        %828 = vmatprep.subr.mxu0 0.0
        %829 = vmatpush1.msra.mxu0 0.0
        %830 = vmatprep.subr.mxu0 0.0
        %831 = vmatpush1.msra.mxu0 0.0
        %832 = vmatprep.subr.mxu0 0.0
        %833 = vmatpush1.msra.mxu0 0.0
        %834 = vmatprep.subr.mxu0 0.0
        %835 = vmatpush1.msra.mxu0 0.0
        %836 = vmatprep.subr.mxu0 0.0
        %837 = vmatpush1.msra.mxu0 0.0
        %838 = vmatprep.subr.mxu0 0.0
        %839 = vmatpush1.msra.mxu0 0.0
        %840 = vmatprep.subr.mxu0 0.0
        %841 = vmatpush1.msra.mxu0 0.0
        %842 = vmatprep.subr.mxu0 0.0
        %843 = vmatpush1.msra.mxu0 0.0
        %844 = vmatprep.subr.mxu0 0.0
        %845 = vmatpush1.msra.mxu0 0.0
        %846 = vmatprep.subr.mxu0 0.0
        %847 = vmatpush1.msra.mxu0 0.0
        %848 = vmatprep.subr.mxu0 0.0
        %849 = vmatpush1.msra.mxu0 0.0
        %850 = vmatprep.subr.mxu0 0.0
        %851 = vmatpush1.msra.mxu0 0.0
        %852 = vmatprep.subr.mxu0 0.0
        %853 = vmatpush1.msra.mxu0 0.0
        %854 = vmatprep.subr.mxu0 0.0
        %855 = vmatpush1.msra.mxu0 0.0
        %856 = vmatprep.subr.mxu0 0.0
        %857 = vmatpush1.msra.mxu0 0.0
        %858 = vmatprep.subr.mxu0 0.0
        %859 = vmatpush1.msra.mxu0 0.0
        %860 = vmatprep.mubr.f32.mxu0 0.0
        %861 = vmatmul.mubr.f32.gmra.mrb[0].mxu0 %v406
        %v862 = vpop.f32.mrb[0].mxu0
        %v863 = vadd.f32 0.0, %v862
        %v864 = vpop.f32.mrb[0].mxu0
        %865 = vdwg.mxu0
        %v866 = vlaneseq
        %v867 = vshrl.u32 %v866, 7
        %v868 = vsub.s32 5, %v867
        %v869 = vrot.slane %v371, %v868
        %871 = vbcast.lane.b32.xlu0 %v869, 256
        %v872 = vpop.permute.xlu0 %871
        %s874 = sor.u32 256, 8
        %875 = vbcast.lane.b32.xlu0 %v869, %s874
        %v876 = vpop.permute.xlu0 %875
        %s878 = sor.u32 256, 16
        %879 = vbcast.lane.b32.xlu0 %v869, %s878
        %v880 = vpop.permute.xlu0 %879
        %s882 = sor.u32 256, 24
        %883 = vbcast.lane.b32.xlu0 %v869, %s882
        %v884 = vpop.permute.xlu0 %883
        %v885 = vadd.f32 %v372, %v872
        %v886 = vadd.f32 %v373, %v876
        %v887 = vadd.f32 %v374, %v880
        %v888 = vadd.f32 %v375, %v884
        %v889 = vtanh.pop %v885
        %v890 = vtanh.pop %v886
        %v891 = vtanh.pop %v887
        %v892 = vtanh.pop %v888
        %893 = vmatprep.subr.mxu0 0.0
        %894 = vmatpush1.msra.mxu0 %v889
        %895 = vmatprep.subr.mxu0 0.0
        %896 = vmatpush1.msra.mxu0 %v890
        %897 = vmatprep.subr.mxu0 0.0
        %898 = vmatpush1.msra.mxu0 %v891
        %899 = vmatprep.subr.mxu0 0.0
        %900 = vmatpush1.msra.mxu0 %v892
        %901 = vmatprep.subr.mxu0 0.0
        %902 = vmatpush1.msra.mxu0 0.0
        %903 = vmatprep.subr.mxu0 0.0
        %904 = vmatpush1.msra.mxu0 0.0
        %905 = vmatprep.subr.mxu0 0.0
        %906 = vmatpush1.msra.mxu0 0.0
        %907 = vmatprep.subr.mxu0 0.0
        %908 = vmatpush1.msra.mxu0 0.0
        %909 = vmatprep.subr.mxu0 0.0
        %910 = vmatpush1.msra.mxu0 0.0
        %911 = vmatprep.subr.mxu0 0.0
        %912 = vmatpush1.msra.mxu0 0.0
        %913 = vmatprep.subr.mxu0 0.0
        %914 = vmatpush1.msra.mxu0 0.0
        %915 = vmatprep.subr.mxu0 0.0
        %916 = vmatpush1.msra.mxu0 0.0
        %917 = vmatprep.subr.mxu0 0.0
        %918 = vmatpush1.msra.mxu0 0.0
        %919 = vmatprep.subr.mxu0 0.0
        %920 = vmatpush1.msra.mxu0 0.0
        %921 = vmatprep.subr.mxu0 0.0
        %922 = vmatpush1.msra.mxu0 0.0
        %923 = vmatprep.subr.mxu0 0.0
        %924 = vmatpush1.msra.mxu0 0.0
        %925 = vmatprep.subr.mxu0 0.0
        %926 = vmatpush1.msra.mxu0 0.0
        %927 = vmatprep.subr.mxu0 0.0
        %928 = vmatpush1.msra.mxu0 0.0
        %929 = vmatprep.subr.mxu0 0.0
        %930 = vmatpush1.msra.mxu0 0.0
        %931 = vmatprep.subr.mxu0 0.0
        %932 = vmatpush1.msra.mxu0 0.0
        %933 = vmatprep.subr.mxu0 0.0
        %934 = vmatpush1.msra.mxu0 0.0
        %935 = vmatprep.subr.mxu0 0.0
        %936 = vmatpush1.msra.mxu0 0.0
        %937 = vmatprep.subr.mxu0 0.0
        %938 = vmatpush1.msra.mxu0 0.0
        %939 = vmatprep.subr.mxu0 0.0
        %940 = vmatpush1.msra.mxu0 0.0
        %941 = vmatprep.subr.mxu0 0.0
        %942 = vmatpush1.msra.mxu0 0.0
        %943 = vmatprep.subr.mxu0 0.0
        %944 = vmatpush1.msra.mxu0 0.0
        %945 = vmatprep.subr.mxu0 0.0
        %946 = vmatpush1.msra.mxu0 0.0
        %947 = vmatprep.subr.mxu0 0.0
        %948 = vmatpush1.msra.mxu0 0.0
        %949 = vmatprep.subr.mxu0 0.0
        %950 = vmatpush1.msra.mxu0 0.0
        %951 = vmatprep.subr.mxu0 0.0
        %952 = vmatpush1.msra.mxu0 0.0
        %953 = vmatprep.subr.mxu0 0.0
        %954 = vmatpush1.msra.mxu0 0.0
        %955 = vmatprep.subr.mxu0 0.0
        %956 = vmatpush1.msra.mxu0 0.0
        %957 = vmatprep.mubr.f32.mxu0 0.0
        %958 = vmatmul.mubr.f32.gmra.mrb[0].mxu0 %v406
        %v959 = vpop.f32.mrb[0].mxu0
        %v960 = vadd.f32 0.0, %v959
        %v961 = vpop.f32.mrb[0].mxu0
        %962 = vdwg.mxu0
        %v963 = vlaneseq
        %v964 = vshrl.u32 %v963, 7
        %v965 = vsub.s32 6, %v964
        %v966 = vrot.slane %v371, %v965
        %968 = vbcast.lane.b32.xlu0 %v966, 256
        %v969 = vpop.permute.xlu0 %968
        %s971 = sor.u32 256, 8
        %972 = vbcast.lane.b32.xlu0 %v966, %s971
        %v973 = vpop.permute.xlu0 %972
        %s975 = sor.u32 256, 16
        %976 = vbcast.lane.b32.xlu0 %v966, %s975
        %v977 = vpop.permute.xlu0 %976
        %s979 = sor.u32 256, 24
        %980 = vbcast.lane.b32.xlu0 %v966, %s979
        %v981 = vpop.permute.xlu0 %980
        %v982 = vadd.f32 %v372, %v969
        %v983 = vadd.f32 %v373, %v973
        %v984 = vadd.f32 %v374, %v977
        %v985 = vadd.f32 %v375, %v981
        %v986 = vtanh.pop %v982
        %v987 = vtanh.pop %v983
        %v988 = vtanh.pop %v984
        %v989 = vtanh.pop %v985
        %990 = vmatprep.subr.mxu0 0.0
        %991 = vmatpush1.msra.mxu0 %v986
        %992 = vmatprep.subr.mxu0 0.0
        %993 = vmatpush1.msra.mxu0 %v987
        %994 = vmatprep.subr.mxu0 0.0
        %995 = vmatpush1.msra.mxu0 %v988
        %996 = vmatprep.subr.mxu0 0.0
        %997 = vmatpush1.msra.mxu0 %v989
        %998 = vmatprep.subr.mxu0 0.0
        %999 = vmatpush1.msra.mxu0 0.0
        %1000 = vmatprep.subr.mxu0 0.0
        %1001 = vmatpush1.msra.mxu0 0.0
        %1002 = vmatprep.subr.mxu0 0.0
        %1003 = vmatpush1.msra.mxu0 0.0
        %1004 = vmatprep.subr.mxu0 0.0
        %1005 = vmatpush1.msra.mxu0 0.0
        %1006 = vmatprep.subr.mxu0 0.0
        %1007 = vmatpush1.msra.mxu0 0.0
        %1008 = vmatprep.subr.mxu0 0.0
        %1009 = vmatpush1.msra.mxu0 0.0
        %1010 = vmatprep.subr.mxu0 0.0
        %1011 = vmatpush1.msra.mxu0 0.0
        %1012 = vmatprep.subr.mxu0 0.0
        %1013 = vmatpush1.msra.mxu0 0.0
        %1014 = vmatprep.subr.mxu0 0.0
        %1015 = vmatpush1.msra.mxu0 0.0
        %1016 = vmatprep.subr.mxu0 0.0
        %1017 = vmatpush1.msra.mxu0 0.0
        %1018 = vmatprep.subr.mxu0 0.0
        %1019 = vmatpush1.msra.mxu0 0.0
        %1020 = vmatprep.subr.mxu0 0.0
        %1021 = vmatpush1.msra.mxu0 0.0
        %1022 = vmatprep.subr.mxu0 0.0
        %1023 = vmatpush1.msra.mxu0 0.0
        %1024 = vmatprep.subr.mxu0 0.0
        %1025 = vmatpush1.msra.mxu0 0.0
        %1026 = vmatprep.subr.mxu0 0.0
        %1027 = vmatpush1.msra.mxu0 0.0
        %1028 = vmatprep.subr.mxu0 0.0
        %1029 = vmatpush1.msra.mxu0 0.0
        %1030 = vmatprep.subr.mxu0 0.0
        %1031 = vmatpush1.msra.mxu0 0.0
        %1032 = vmatprep.subr.mxu0 0.0
        %1033 = vmatpush1.msra.mxu0 0.0
        %1034 = vmatprep.subr.mxu0 0.0
        %1035 = vmatpush1.msra.mxu0 0.0
        %1036 = vmatprep.subr.mxu0 0.0
        %1037 = vmatpush1.msra.mxu0 0.0
        %1038 = vmatprep.subr.mxu0 0.0
        %1039 = vmatpush1.msra.mxu0 0.0
        %1040 = vmatprep.subr.mxu0 0.0
        %1041 = vmatpush1.msra.mxu0 0.0
        %1042 = vmatprep.subr.mxu0 0.0
        %1043 = vmatpush1.msra.mxu0 0.0
        %1044 = vmatprep.subr.mxu0 0.0
        %1045 = vmatpush1.msra.mxu0 0.0
        %1046 = vmatprep.subr.mxu0 0.0
        %1047 = vmatpush1.msra.mxu0 0.0
        %1048 = vmatprep.subr.mxu0 0.0
        %1049 = vmatpush1.msra.mxu0 0.0
        %1050 = vmatprep.subr.mxu0 0.0
        %1051 = vmatpush1.msra.mxu0 0.0
        %1052 = vmatprep.subr.mxu0 0.0
        %1053 = vmatpush1.msra.mxu0 0.0
        %1054 = vmatprep.mubr.f32.mxu0 0.0
        %1055 = vmatmul.mubr.f32.gmra.mrb[0].mxu0 %v406
        %v1056 = vpop.f32.mrb[0].mxu0
        %v1057 = vadd.f32 0.0, %v1056
        %v1058 = vpop.f32.mrb[0].mxu0
        %1059 = vdwg.mxu0
        %v1060 = vlaneseq
        %v1061 = vshrl.u32 %v1060, 7
        %v1062 = vsub.s32 7, %v1061
        %v1063 = vrot.slane %v371, %v1062
        %1065 = vbcast.lane.b32.xlu0 %v1063, 256
        %v1066 = vpop.permute.xlu0 %1065
        %s1068 = sor.u32 256, 8
        %1069 = vbcast.lane.b32.xlu0 %v1063, %s1068
        %v1070 = vpop.permute.xlu0 %1069
        %s1072 = sor.u32 256, 16
        %1073 = vbcast.lane.b32.xlu0 %v1063, %s1072
        %v1074 = vpop.permute.xlu0 %1073
        %s1076 = sor.u32 256, 24
        %1077 = vbcast.lane.b32.xlu0 %v1063, %s1076
        %v1078 = vpop.permute.xlu0 %1077
        %v1079 = vadd.f32 %v372, %v1066
        %v1080 = vadd.f32 %v373, %v1070
        %v1081 = vadd.f32 %v374, %v1074
        %v1082 = vadd.f32 %v375, %v1078
        %v1083 = vtanh.pop %v1079
        %v1084 = vtanh.pop %v1080
        %v1085 = vtanh.pop %v1081
        %v1086 = vtanh.pop %v1082
        %1087 = vmatprep.subr.mxu0 0.0
        %1088 = vmatpush1.msra.mxu0 %v1083
        %1089 = vmatprep.subr.mxu0 0.0
        %1090 = vmatpush1.msra.mxu0 %v1084
        %1091 = vmatprep.subr.mxu0 0.0
        %1092 = vmatpush1.msra.mxu0 %v1085
        %1093 = vmatprep.subr.mxu0 0.0
        %1094 = vmatpush1.msra.mxu0 %v1086
        %1095 = vmatprep.subr.mxu0 0.0
        %1096 = vmatpush1.msra.mxu0 0.0
        %1097 = vmatprep.subr.mxu0 0.0
        %1098 = vmatpush1.msra.mxu0 0.0
        %1099 = vmatprep.subr.mxu0 0.0
        %1100 = vmatpush1.msra.mxu0 0.0
        %1101 = vmatprep.subr.mxu0 0.0
        %1102 = vmatpush1.msra.mxu0 0.0
        %1103 = vmatprep.subr.mxu0 0.0
        %1104 = vmatpush1.msra.mxu0 0.0
        %1105 = vmatprep.subr.mxu0 0.0
        %1106 = vmatpush1.msra.mxu0 0.0
        %1107 = vmatprep.subr.mxu0 0.0
        %1108 = vmatpush1.msra.mxu0 0.0
        %1109 = vmatprep.subr.mxu0 0.0
        %1110 = vmatpush1.msra.mxu0 0.0
        %1111 = vmatprep.subr.mxu0 0.0
        %1112 = vmatpush1.msra.mxu0 0.0
        %1113 = vmatprep.subr.mxu0 0.0
        %1114 = vmatpush1.msra.mxu0 0.0
        %1115 = vmatprep.subr.mxu0 0.0
        %1116 = vmatpush1.msra.mxu0 0.0
        %1117 = vmatprep.subr.mxu0 0.0
        %1118 = vmatpush1.msra.mxu0 0.0
        %1119 = vmatprep.subr.mxu0 0.0
        %1120 = vmatpush1.msra.mxu0 0.0
        %1121 = vmatprep.subr.mxu0 0.0
        %1122 = vmatpush1.msra.mxu0 0.0
        %1123 = vmatprep.subr.mxu0 0.0
        %1124 = vmatpush1.msra.mxu0 0.0
        %1125 = vmatprep.subr.mxu0 0.0
        %1126 = vmatpush1.msra.mxu0 0.0
        %1127 = vmatprep.subr.mxu0 0.0
        %1128 = vmatpush1.msra.mxu0 0.0
        %1129 = vmatprep.subr.mxu0 0.0
        %1130 = vmatpush1.msra.mxu0 0.0
        %1131 = vmatprep.subr.mxu0 0.0
        %1132 = vmatpush1.msra.mxu0 0.0
        %1133 = vmatprep.subr.mxu0 0.0
        %1134 = vmatpush1.msra.mxu0 0.0
        %1135 = vmatprep.subr.mxu0 0.0
        %1136 = vmatpush1.msra.mxu0 0.0
        %1137 = vmatprep.subr.mxu0 0.0
        %1138 = vmatpush1.msra.mxu0 0.0
        %1139 = vmatprep.subr.mxu0 0.0
        %1140 = vmatpush1.msra.mxu0 0.0
        %1141 = vmatprep.subr.mxu0 0.0
        %1142 = vmatpush1.msra.mxu0 0.0
        %1143 = vmatprep.subr.mxu0 0.0
        %1144 = vmatpush1.msra.mxu0 0.0
        %1145 = vmatprep.subr.mxu0 0.0
        %1146 = vmatpush1.msra.mxu0 0.0
        %1147 = vmatprep.subr.mxu0 0.0
        %1148 = vmatpush1.msra.mxu0 0.0
        %1149 = vmatprep.subr.mxu0 0.0
        %1150 = vmatpush1.msra.mxu0 0.0
        %1151 = vmatprep.mubr.f32.mxu0 0.0
        %1152 = vmatmul.mubr.f32.gmra.mrb[0].mxu0 %v406
        %v1153 = vpop.f32.mrb[0].mxu0
        %v1154 = vadd.f32 0.0, %v1153
        %v1155 = vpop.f32.mrb[0].mxu0
        %1156 = vdwg.mxu0
        %v1158 = vrot.slane %v572, 7
        %v1161 = vrot.slane %v669, 6
        %v1164 = vrot.slane %v766, 5
        %v1167 = vrot.slane %v863, 4
        %v1170 = vrot.slane %v960, 3
        %v1173 = vrot.slane %v1057, 2
        %v1176 = vrot.slane %v1154, 1
        %vm1178 = vcmask 1040384
        %v1179 = vsel %vm1178, %v475, %v1158
        %vm1180 = vcmask 1041408
        %v1181 = vsel %vm1180, %v1179, %v1161
        %vm1182 = vcmask 1042432
        %v1183 = vsel %vm1182, %v1181, %v1164
        %vm1184 = vcmask 1043456
        %v1185 = vsel %vm1184, %v1183, %v1167
        %vm1186 = vcmask 1044480
        %v1187 = vsel %vm1186, %v1185, %v1170
        %vm1188 = vcmask 1045504
        %v1189 = vsel %vm1188, %v1187, %v1173
        %vm1190 = vcmask 1046528
        %v1191 = vsel %vm1190, %v1189, %v1176
        %v1192 = vld [vmem:[#allocation2] sm:$0x1]
        %v1194 = vlaneseq
        %v1195 = vshrl.u32 %v1194, 7
        %v1196 = vsub.s32 0, %v1195
        %v1197 = vrot.slane %v1192, %v1196
        %1198 = vset.pattern.permute.xlu0 0
        %1199 = vperm.xlu0 %1198, %v1197
        %v1200 = vpop.permute.xlu0 %1199
        %v1202 = vadd.f32 %v1191, %v1200
        %v1203 = vld [vmem:[%s365] sm:$0x1]
        %vm1204 = vcmp.gt.f32.partialorder %v1203, 0.0
        %v1205 = vsel %vm1204, 1, 0
        %v1206 = vlaneseq
        %v1207 = vshrl.u32 %v1206, 7
        %v1208 = vsub.s32 0, %v1207
        %v1209 = vrot.slane %v1205, %v1208
        %vm1210 = vcmp.eq.s32.totalorder %v1209, 1
        %v1211 = vsel %vm1210, %v1202, -inf
        %1212 = vmax.xlane.f32.xlu0 %v1211
        %v1213 = vpop.xlane.xlu0 %1212
        %v1214 = vmax.f32 %v1213, 0.0
        %v1215 = vsub.f32 %v1202, %v1214
        %v1216 = vmul.f32 %v1215, 1.442695
        %v1217 = vpow.pop %v1216
        %v1218 = vsel %vm1210, %v1217, 0.0
        %1219 = vadd.xlane.f32.xlu0 %v1218
        %v1220 = vpop.xlane.xlu0 %1219
        %v1221 = vsub.f32 0.0, %v1214
        %v1222 = vmul.f32 %v1221, 1.442695
        %v1223 = vpow.pop %v1222
        %v1224 = vmul.f32 %v1223, 1e-05
        %v1225 = vadd.f32 %v1220, %v1224
        %v1226 = vrcp.pop %v1225
        %v1227 = vmul.f32 1.0, %v1226
        %v1228 = vmul.f32 %v1218, %v1227
        %1229 = vst [vmem:[%s349] sm:$0xff] %v1228
        %v1230 = vld [vmem:[%s370] sm:$0xff]
        %v1231 = vld [vmem:[%s370 + $0x8] sm:$0xff]
        %v1232 = vld [vmem:[%s370 + $0x10] sm:$0xff]
        %v1233 = vld [vmem:[%s370 + $0x18] sm:$0xff]
        %v1234 = vld [vmem:[%s370 + $0x20] sm:$0xff]
        %v1235 = vld [vmem:[%s370 + $0x28] sm:$0xff]
        %v1236 = vld [vmem:[%s370 + $0x30] sm:$0xff]
        %v1237 = vld [vmem:[%s370 + $0x38] sm:$0xff]
        %v1238 = vld [vmem:[%s370 + $0x40] sm:$0xff]
        %v1239 = vld [vmem:[%s370 + $0x48] sm:$0xff]
        %v1240 = vld [vmem:[%s370 + $0x50] sm:$0xff]
        %v1241 = vld [vmem:[%s370 + $0x58] sm:$0xff]
        %v1242 = vld [vmem:[%s370 + $0x60] sm:$0xff]
        %v1243 = vld [vmem:[%s370 + $0x68] sm:$0xff]
        %v1244 = vld [vmem:[%s370 + $0x70] sm:$0xff]
        %v1245 = vld [vmem:[%s370 + $0x78] sm:$0xff]
        %1246 = vmatprep.subr.mxu0 0.0
        %1247 = vmatpush1.msra.mxu0 %v1230
        %1248 = vmatprep.subr.mxu0 0.0
        %1249 = vmatpush1.msra.mxu0 %v1231
        %1250 = vmatprep.subr.mxu0 0.0
        %1251 = vmatpush1.msra.mxu0 %v1232
        %1252 = vmatprep.subr.mxu0 0.0
        %1253 = vmatpush1.msra.mxu0 %v1233
        %1254 = vmatprep.subr.mxu0 0.0
        %1255 = vmatpush1.msra.mxu0 %v1234
        %1256 = vmatprep.subr.mxu0 0.0
        %1257 = vmatpush1.msra.mxu0 %v1235
        %1258 = vmatprep.subr.mxu0 0.0
        %1259 = vmatpush1.msra.mxu0 %v1236
        %1260 = vmatprep.subr.mxu0 0.0
        %1261 = vmatpush1.msra.mxu0 %v1237
        %1262 = vmatprep.subr.mxu0 0.0
        %1263 = vmatpush1.msra.mxu0 %v1238
        %1264 = vmatprep.subr.mxu0 0.0
        %1265 = vmatpush1.msra.mxu0 %v1239
        %1266 = vmatprep.subr.mxu0 0.0
        %1267 = vmatpush1.msra.mxu0 %v1240
        %1268 = vmatprep.subr.mxu0 0.0
        %1269 = vmatpush1.msra.mxu0 %v1241
        %1270 = vmatprep.subr.mxu0 0.0
        %1271 = vmatpush1.msra.mxu0 %v1242
        %1272 = vmatprep.subr.mxu0 0.0
        %1273 = vmatpush1.msra.mxu0 %v1243
        %1274 = vmatprep.subr.mxu0 0.0
        %1275 = vmatpush1.msra.mxu0 %v1244
        %1276 = vmatprep.subr.mxu0 0.0
        %1277 = vmatpush1.msra.mxu0 %v1245
        %1278 = vmatprep.subr.mxu0 0.0
        %1279 = vmatpush1.msra.mxu0 0.0
        %1280 = vmatprep.subr.mxu0 0.0
        %1281 = vmatpush1.msra.mxu0 0.0
        %1282 = vmatprep.subr.mxu0 0.0
        %1283 = vmatpush1.msra.mxu0 0.0
        %1284 = vmatprep.subr.mxu0 0.0
        %1285 = vmatpush1.msra.mxu0 0.0
        %1286 = vmatprep.subr.mxu0 0.0
        %1287 = vmatpush1.msra.mxu0 0.0
        %1288 = vmatprep.subr.mxu0 0.0
        %1289 = vmatpush1.msra.mxu0 0.0
        %1290 = vmatprep.subr.mxu0 0.0
        %1291 = vmatpush1.msra.mxu0 0.0
        %1292 = vmatprep.subr.mxu0 0.0
        %1293 = vmatpush1.msra.mxu0 0.0
        %1294 = vmatprep.subr.mxu0 0.0
        %1295 = vmatpush1.msra.mxu0 0.0
        %1296 = vmatprep.subr.mxu0 0.0
        %1297 = vmatpush1.msra.mxu0 0.0
        %1298 = vmatprep.subr.mxu0 0.0
        %1299 = vmatpush1.msra.mxu0 0.0
        %1300 = vmatprep.subr.mxu0 0.0
        %1301 = vmatpush1.msra.mxu0 0.0
        %1302 = vmatprep.subr.mxu0 0.0
        %1303 = vmatpush1.msra.mxu0 0.0
        %1304 = vmatprep.subr.mxu0 0.0
        %1305 = vmatpush1.msra.mxu0 0.0
        %1306 = vmatprep.subr.mxu0 0.0
        %1307 = vmatpush1.msra.mxu0 0.0
        %1308 = vmatprep.subr.mxu0 0.0
        %1309 = vmatpush1.msra.mxu0 0.0
        %1310 = vmatprep.mubr.f32.mxu0 0.0
        %1311 = vmatmul.mubr.f32.gmra.mrb[0].mxu0 %v1228
        %v1312 = vpop.f32.mrb[0].mxu0
        %v1313 = vadd.f32 0.0, %v1312
        %v1314 = vpop.f32.mrb[0].mxu0
        %1315 = vdwg.mxu0
        %1316 = vst.msk [vmem:[%s342] sm:$0xff] %vm404, %v1313
        %s1317 = sand.u32 %s197, 1
        %s1318 = scalar_lea.sflag [#allocation4], %s1317
        %s1319 = sand.u32 %s197, 1
        %s1320 = smul.addr %s1319, 8
        %s1321 = scalar_lea.vmem [#allocation3], %s1320
        %s1322 = sand.u32 %s225, 1
        %s1323 = scalar_lea.sflag [#allocation6], %s1322
        %s1324 = sand.u32 %s225, 1
        %s1325 = smul.addr %s1324, 8
        %s1326 = scalar_lea.vmem [#allocation5], %s1325
        // Predicated region
        $region45: #{tpu_custom_call.1} parent=43 // pred_check
          %p1327 = pneg %p207
        $region46: #{tpu_custom_call.1} parent=43 // pred_check_branch
          %1329 = sbr.rel (%p1327) target = $region48
        $region47: #{tpu_custom_call.1} parent=43 // pred_region
          %s1331 = ssub.s32 128, 128
          %1332 = vsyncadd %s1318, %s1331
          %s1333 = smul.addr %s31, 2
          %s1334 = sadd.s32 %s32, %s1333
          %s1335 = smul.addr %s1334, 128
          %s1336 = scalar_lea.hbm %s6, %s1335
          %s1338 = sshll.u32 %s1321, 4
          %s1339 = int_to_ptr.vmem [resolvable:$true] %s1338
          %1341 = dma.vmem_to_hbm [thread:$0]  %s1339, 128, %s1336, %s1318
        $region48: #{tpu_custom_call.1} parent=43 // pred_fallthru
          _
        // Predicated region
        $region49: #{tpu_custom_call.1} parent=43 // pred_check
          %p1342 = pneg %p235
        $region50: #{tpu_custom_call.1} parent=43 // pred_check_branch
          %1344 = sbr.rel (%p1342) target = $region52
        $region51: #{tpu_custom_call.1} parent=43 // pred_region
          %s1346 = ssub.s32 128, 128
          %1347 = vsyncadd %s1323, %s1346
          %s1348 = smul.addr %s31, 2
          %s1349 = sadd.s32 %s32, %s1348
          %s1350 = smul.addr %s1349, 128
          %s1351 = scalar_lea.hbm %s7, %s1350
          %s1353 = sshll.u32 %s1326, 4
          %s1354 = int_to_ptr.vmem [resolvable:$true] %s1353
          %1356 = dma.vmem_to_hbm [thread:$0]  %s1354, 128, %s1351, %s1323
        $region52: #{tpu_custom_call.1} parent=43 // pred_fallthru
          _
      $region44: #{tpu_custom_call.1} parent=5 // pred_fallthru
        _
      %p1357 = scmp.le.s32.totalorder 2, %s22
      // Predicated region
      $region53: #{tpu_custom_call.1} parent=5 // pred_check
        %p1358 = pneg %p1357
      $region54: #{tpu_custom_call.1} parent=5 // pred_check_branch
        %1360 = sbr.rel (%p1358) target = $region56
      $region55: #{tpu_custom_call.1} parent=5 // pred_region
        %s1361 = ssub.s32 %s22, 2
        // Predicated region
        $region57: #{tpu_custom_call.1} parent=55 // pred_check
          %p1362 = pneg %p213
        $region58: #{tpu_custom_call.1} parent=55 // pred_check_branch
          %1364 = sbr.rel (%p1362) target = $region60
        $region59: #{tpu_custom_call.1} parent=55 // pred_region
          %s1365 = sand.u32 %s198, 1
          %s1366 = scalar_lea.sflag [#allocation4], %s1365
          %s1367 = sand.u32 %s198, 1
          %s1368 = smul.addr %s1367, 8
          %s1369 = scalar_lea.vmem [#allocation3], %s1368
          %1370 = dma.done %s1366, 128
        $region60: #{tpu_custom_call.1} parent=55 // pred_fallthru
          _
        // Predicated region
        $region61: #{tpu_custom_call.1} parent=55 // pred_check
          %p1371 = pneg %p241
        $region62: #{tpu_custom_call.1} parent=55 // pred_check_branch
          %1373 = sbr.rel (%p1371) target = $region64
        $region63: #{tpu_custom_call.1} parent=55 // pred_region
          %s1374 = sand.u32 %s226, 1
          %s1375 = scalar_lea.sflag [#allocation6], %s1374
          %s1376 = sand.u32 %s226, 1
          %s1377 = smul.addr %s1376, 8
          %s1378 = scalar_lea.vmem [#allocation5], %s1377
          %1379 = dma.done %s1375, 128
        $region64: #{tpu_custom_call.1} parent=55 // pred_fallthru
          _
      $region56: #{tpu_custom_call.1} parent=5 // pred_fallthru
        _
    $region6: #{tpu_custom_call.1} parent=1 // loop_footer
      %s26 = sadd.s32 1, %s22
    $region7: #{tpu_custom_call.1} parent=1 // loop_footer_branch
      %21 = sbr.rel target = $region3
    $region8: #{tpu_custom_call.1} parent=1 // loop_exit
      _
    %1380 = vsyncpa [#allocation4], 1
    %s1381 = scalar_lea.sflag [#allocation4], 1
    %1382 = vsyncpa %s1381, 1
    %1383 = vsyncpa [#allocation6], 1
    %s1384 = scalar_lea.sflag [#allocation6], 1
    %1385 = vsyncpa %s1384, 1

</llo_original>
